<compile_context>
chip_gen: v5e
topology: v5e:2x2
jax: 0.10.0
libtpu: 0.0.40
codegen_flags: <defaults>
</compile_context>

<pallas_src>
import math
import numpy as np
import jax
import jax.numpy as jnp
from jax.experimental import pallas as pl
from jax.experimental.pallas import tpu as pltpu

# ----------------------- model config (small shapes) -----------------------
CHW       = (1, 16, 16)        # (C, H, W)
N_PATCHES = 4
N_BLOCKS  = 2
HIDDEN_D  = 8
N_HEADS   = 2
OUT_D     = 10
MLP_RATIO = 4

PATCH   = CHW[1] // N_PATCHES                 # 4
INPUT_D = CHW[0] * PATCH * PATCH              # 16
S_P     = N_PATCHES * N_PATCHES               # 16 patches
S       = S_P + 1                             # +1 class token
D_HEAD  = HIDDEN_D // N_HEADS                 # 4
MLP_D   = MLP_RATIO * HIDDEN_D                # 32
EPS     = 1e-5
N_BATCH = 2
OUT_PAD = 128                                 # lane-dense padded logits width
NEG_BIG = -1e30

# Grid width: GRID_B = 1 processes the whole batch in one step (best on the
# single-TensorCore v5e/v6e).  Set GRID_B = 2 on v7x to give each of the two
# TensorCores one batch chunk; everything below is derived from it.
GRID_B  = 1
NB_PER  = N_BATCH // GRID_B                   # images per grid step
NS      = NB_PER * S                          # batch-stacked sequence rows

# ---- const-slab row offsets (one (C_ROWS, 128) f32 slab, static slices) ----
R_ADD0  = 0                                   # (NS, D)    cls/pos/bias add term
R_LN    = R_ADD0 + NS                         # (4*NB, D)  [g1, b1, g2, b2] / block
R_BQKV  = R_LN + 4 * N_BLOCKS                 # (NB, 3D)   fused QKV bias (Q scaled)
R_B1    = R_BQKV + N_BLOCKS                   # (NB, MLP_D)
R_B2    = R_B1 + N_BLOCKS                     # (NB, D)
R_BHEAD = R_B2 + N_BLOCKS                     # (1, OUT_PAD), pad lanes = NEG_BIG
R_MASK  = R_BHEAD + 1                         # (NS, NS)  0 same-image / NEG_BIG cross
C_ROWS  = ((R_MASK + NS + 7) // 8) * 8


# ------------------------------ helpers ------------------------------------
def _layernorm(x, g, b):
    mu = jnp.mean(x, axis=-1, keepdims=True)
    var = jnp.mean((x - mu) ** 2, axis=-1, keepdims=True)
    return (x - mu) * jax.lax.rsqrt(var + EPS) * g + b


def _dot(a, b):
    return jnp.dot(a, b, preferred_element_type=jnp.float32)


def _dot_nt(a, b):
    # a @ b.T without materializing a transpose (contract last dims of both)
    return jax.lax.dot_general(a, b, (((1,), (1,)), ((), ())),
                               preferred_element_type=jnp.float32)


def _softmax_attn(x):
    # attention softmax: approx reciprocal goes to the EUP (free bundle slot)
    m = jnp.max(x, axis=-1, keepdims=True)
    e = jnp.exp(x - m)
    return e * pl.reciprocal(jnp.sum(e, axis=-1, keepdims=True), approx=True)


# ------------------------------ kernel --------------------------------------
def vit_kernel(patches_ref, const_ref, wmap_ref, wqkv_ref, w1_ref, w2_ref,
               whead_ref, out_ref):
    D, DH = HIDDEN_D, D_HEAD

    # --- loop-invariant constants (computed/loaded once, hoisted) ---
    lane = jax.lax.broadcasted_iota(jnp.int32, (1, D), 1)
    head_mask = [((lane >= h * DH) & (lane < (h + 1) * DH)).astype(jnp.float32)
                 for h in range(N_HEADS)]
    img_mask = const_ref[R_MASK:R_MASK + NS, 0:NS]       # 0 same-image / -1e30 cross

    # ---- patch embedding + class token + positional embedding (batch fused) ----
    # patches rows b*S are all-zeros; add0 row b*S = cls + pos[0], others bmap+pos.
    x = _dot(patches_ref[...], wmap_ref[...]) + const_ref[R_ADD0:R_ADD0 + NS, 0:D]

    # ---- transformer blocks (unrolled, n_blocks is static) ----
    for blk in range(N_BLOCKS):
        r = R_LN + 4 * blk

        # --- MSA on LayerNorm(x): fused block-diagonal QKV, 1/sqrt(dh) in Q ---
        xn = _layernorm(x, const_ref[r:r + 1, 0:D], const_ref[r + 1:r + 2, 0:D])
        qkv = _dot(xn, wqkv_ref[blk]) \
            + const_ref[R_BQKV + blk:R_BQKV + blk + 1, 0:3 * D]      # (NS, 3D)
        q = qkv[:, 0:D]
        k = qkv[:, D:2 * D]
        v = qkv[:, 2 * D:3 * D]
        attn_out = jnp.zeros_like(x)
        for h in range(N_HEADS):
            # head-lane mask on Q makes the 8-lane contraction equal Q_h @ K_h^T;
            # img_mask kills cross-image attention in the batch-stacked rows.
            s = _dot_nt(q * head_mask[h], k) + img_mask              # (NS, NS)
            p = _softmax_attn(s)
            # masked V places this head's output directly in its lane slot
            attn_out = attn_out + _dot(p, v * head_mask[h])          # (NS, D)
        x = x + attn_out

        # --- MLP on LayerNorm(x) ---
        xn2 = _layernorm(x, const_ref[r + 2:r + 3, 0:D], const_ref[r + 3:r + 4, 0:D])
        hmid = jax.nn.gelu(
            _dot(xn2, w1_ref[blk]) + const_ref[R_B1 + blk:R_B1 + blk + 1, 0:MLP_D],
            approximate=True)                                        # tanh GELU (EUP)
        x = x + _dot(hmid, w2_ref[blk]) + const_ref[R_B2 + blk:R_B2 + blk + 1, 0:D]

    # ---- classification head on the class-token rows (rows b*S) ----
    col = jax.lax.broadcasted_iota(jnp.int32, (NB_PER, NS), 1)
    row = jax.lax.broadcasted_iota(jnp.int32, (NB_PER, NS), 0)
    sel = (col == row * S).astype(jnp.float32)                       # (NB_PER, NS)
    cls_tok = _dot(sel, x)                                           # (NB_PER, D)
    logits = _dot(cls_tok, whead_ref[...]) \
           + const_ref[R_BHEAD:R_BHEAD + 1, 0:OUT_PAD]               # (NB_PER, 128)
    m = jnp.max(logits, axis=-1, keepdims=True)
    e = jnp.exp(logits - m)                                          # pad lanes -> 0
    out_ref[...] = e / jnp.sum(e, axis=-1, keepdims=True)            # exact softmax


# ------------------------------ wrapper --------------------------------------
def _full_spec(shape):
    nd = len(shape)
    return pl.BlockSpec(shape, lambda g, _nd=nd: (0,) * _nd)


def patchify(images):
    # (N, C, H, W) -> (N, n_p^2, C*p*p), same flatten order as the torch reference
    n, c, h, w = images.shape
    x = images.reshape(n, c, N_PATCHES, PATCH, N_PATCHES, PATCH)
    x = x.transpose(0, 2, 4, 1, 3, 5).reshape(n, S_P, INPUT_D)
    return x.astype(jnp.float32)


def vit_forward(images, kp):
    n = images.shape[0]
    assert n == N_BATCH and N_BATCH % GRID_B == 0
    patches = patchify(images)                                       # (n, S_P, INPUT_D)
    # prepend a zero row per image so the class-token row falls out of the same
    # matmul, then stack the batch on the sublane (row) axis.
    patches_ext = jnp.concatenate(
        [jnp.zeros((n, 1, INPUT_D), jnp.float32), patches], axis=1)  # (n, S, INPUT_D)
    patches_flat = patches_ext.reshape(GRID_B, NS, INPUT_D)

    names = ["const", "wmap", "wqkv", "w1", "w2", "whead"]
    args = [patches_flat] + [kp[k] for k in names]

    in_specs = [pl.BlockSpec((pl.Squeezed(), NS, INPUT_D), lambda g: (g, 0, 0))]
    in_specs += [_full_spec(kp[k].shape) for k in names]

    out = pl.pallas_call(
        vit_kernel,
        out_shape=jax.ShapeDtypeStruct((n, OUT_PAD), jnp.float32),
        grid_spec=pltpu.PrefetchScalarGridSpec(
            num_scalar_prefetch=0,
            grid=(GRID_B,),
            in_specs=in_specs,
            out_specs=pl.BlockSpec((NB_PER, OUT_PAD), lambda g: (g, 0)),
        ),
        compiler_params=pltpu.CompilerParams(
            dimension_semantics=("parallel",)),
    )(*args)
    return out[:, :OUT_D]


# ------------------------------ parameters -----------------------------------
def get_positional_embeddings(sequence_length, d):
    result = np.ones((sequence_length, d), dtype=np.float32)
    for i in range(sequence_length):
        for j in range(d):
            if j % 2 == 0:
                result[i][j] = np.sin(i / 10000 ** (j / d))
            else:
                result[i][j] = np.cos(i / 10000 ** ((j - 1) / d))
    return jnp.asarray(result)


def init_params(key):
    ks = iter(jax.random.split(key, 40))

    def lin(k, fan_in, fan_out):
        lim = 1.0 / math.sqrt(fan_in)
        kw, kb = jax.random.split(k)
        w = jax.random.uniform(kw, (fan_in, fan_out), jnp.float32, -lim, lim)
        b = jax.random.uniform(kb, (1, fan_out), jnp.float32, -lim, lim)
        return w, b

    params = {}
    params["wmap"], params["bmap"] = lin(next(ks), INPUT_D, HIDDEN_D)
    params["cls"] = jax.random.uniform(next(ks), (1, HIDDEN_D), jnp.float32)
    params["pos"] = get_positional_embeddings(S, HIDDEN_D)

    # per-block LayerNorm params: (N_BLOCKS, 1, HIDDEN_D)
    params["n1g"] = jnp.ones((N_BLOCKS, 1, HIDDEN_D), jnp.float32)
    params["n1b"] = jnp.zeros((N_BLOCKS, 1, HIDDEN_D), jnp.float32)
    params["n2g"] = jnp.ones((N_BLOCKS, 1, HIDDEN_D), jnp.float32)
    params["n2b"] = jnp.zeros((N_BLOCKS, 1, HIDDEN_D), jnp.float32)

    # per-(block, head) Q/K/V linears, flattened to (N_BLOCKS*N_HEADS, ...)
    for name in ("q", "k", "v"):
        ws, bs = [], []
        for _ in range(N_BLOCKS * N_HEADS):
            w, b = lin(next(ks), D_HEAD, D_HEAD)
            ws.append(w)
            bs.append(b)
        params["w" + name] = jnp.stack(ws)            # (NB*NH, d_head, d_head)
        params["b" + name] = jnp.stack(bs)            # (NB*NH, 1, d_head)

    # per-block MLP
    w1s, b1s, w2s, b2s = [], [], [], []
    for _ in range(N_BLOCKS):
        w1, b1 = lin(next(ks), HIDDEN_D, MLP_D)
        w2, b2 = lin(next(ks), MLP_D, HIDDEN_D)
        w1s.append(w1); b1s.append(b1); w2s.append(w2); b2s.append(b2)
    params["w1"] = jnp.stack(w1s)                     # (NB, D, MLP_D)
    params["b1"] = jnp.stack(b1s)                     # (NB, 1, MLP_D)
    params["w2"] = jnp.stack(w2s)                     # (NB, MLP_D, D)
    params["b2"] = jnp.stack(b2s)                     # (NB, 1, D)

    # classification head
    params["whead"], params["bhead"] = lin(next(ks), HIDDEN_D, OUT_D)
    return params


def pack_params(params):
    """Fuse / consolidate raw (torch-equivalent) params into kernel arrays."""
    D, DH, NB, NH = HIDDEN_D, D_HEAD, N_BLOCKS, N_HEADS
    scale = 1.0 / math.sqrt(DH)

    # fused block-diagonal QKV weights per block, Q pre-scaled by 1/sqrt(d_head)
    wqkv = np.zeros((NB, D, 3 * D), np.float32)
    bqkv = np.zeros((NB, 3 * D), np.float32)
    for blk in range(NB):
        for h in range(NH):
            idx = blk * NH + h
            r = slice(h * DH, (h + 1) * DH)
            wqkv[blk, r, h * DH:(h + 1) * DH] = np.asarray(params["wq"][idx]) * scale
            wqkv[blk, r, D + h * DH:D + (h + 1) * DH] = np.asarray(params["wk"][idx])
            wqkv[blk, r, 2 * D + h * DH:2 * D + (h + 1) * DH] = np.asarray(params["wv"][idx])
            bqkv[blk, h * DH:(h + 1) * DH] = np.asarray(params["bq"][idx][0]) * scale
            bqkv[blk, D + h * DH:D + (h + 1) * DH] = np.asarray(params["bk"][idx][0])
            bqkv[blk, 2 * D + h * DH:2 * D + (h + 1) * DH] = np.asarray(params["bv"][idx][0])

    # lane-dense classification head: pad OUT_D -> 128 (pad weight cols = 0)
    whead = jnp.zeros((D, OUT_PAD), jnp.float32).at[:, :OUT_D].set(params["whead"])

    # ---- constant slab: all small per-block constants in one VMEM-friendly array
    slab = np.zeros((C_ROWS, 128), np.float32)
    add0 = np.concatenate([np.asarray(params["cls"] + params["pos"][0:1]),
                           np.asarray(params["bmap"] + params["pos"][1:S])], axis=0)
    slab[R_ADD0:R_ADD0 + NS, :D] = np.tile(add0, (NB_PER, 1))        # per-image tiled
    for blk in range(NB):
        slab[R_LN + 4 * blk + 0, :D] = np.asarray(params["n1g"][blk, 0])
        slab[R_LN + 4 * blk + 1, :D] = np.asarray(params["n1b"][blk, 0])
        slab[R_LN + 4 * blk + 2, :D] = np.asarray(params["n2g"][blk, 0])
        slab[R_LN + 4 * blk + 3, :D] = np.asarray(params["n2b"][blk, 0])
        slab[R_BQKV + blk, :3 * D] = bqkv[blk]
        slab[R_B1 + blk, :MLP_D] = np.asarray(params["b1"][blk, 0])
        slab[R_B2 + blk, :D] = np.asarray(params["b2"][blk, 0])
    slab[R_BHEAD, :] = NEG_BIG                                       # pad bias -> 0 after exp
    slab[R_BHEAD, :OUT_D] = np.asarray(params["bhead"][0])
    img = np.arange(NS) // S                                         # image id per row
    slab[R_MASK:R_MASK + NS, :NS] = np.where(img[:, None] == img[None, :], 0.0, NEG_BIG)

    return dict(const=jnp.asarray(slab),
                wmap=params["wmap"],
                wqkv=jnp.asarray(wqkv),
                w1=params["w1"], w2=params["w2"],
                whead=whead)


# ------------------------ pure-JAX reference (for checking) ------------------
def vit_reference(images, params):
    patches = patchify(images)
    n = images.shape[0]
    tokens = patches @ params["wmap"] + params["bmap"]
    cls = jnp.broadcast_to(params["cls"], (n, 1, HIDDEN_D))
    x = jnp.concatenate([cls, tokens], axis=1) + params["pos"][None]
    for blk in range(N_BLOCKS):
        xn = _layernorm(x, params["n1g"][blk], params["n1b"][blk])
        heads = []
        for h in range(N_HEADS):
            idx = blk * N_HEADS + h
            seq = xn[:, :, h * D_HEAD:(h + 1) * D_HEAD]
            q = seq @ params["wq"][idx] + params["bq"][idx]
            k = seq @ params["wk"][idx] + params["bk"][idx]
            v = seq @ params["wv"][idx] + params["bv"][idx]
            att = jax.nn.softmax(
                jnp.einsum('nsd,ntd->nst', q, k) / math.sqrt(D_HEAD), axis=-1)
            heads.append(jnp.einsum('nst,ntd->nsd', att, v))
        x = x + jnp.concatenate(heads, axis=-1)
        xn2 = _layernorm(x, params["n2g"][blk], params["n2b"][blk])
        h1 = jax.nn.gelu(xn2 @ params["w1"][blk] + params["b1"][blk],
                         approximate=False)                          # exact, like torch
        x = x + h1 @ params["w2"][blk] + params["b2"][blk]
    logits = x[:, 0] @ params["whead"] + params["bhead"]
    return jax.nn.softmax(logits, axis=-1)


# ------------------------------ main ------------------------------------------
if __name__ == "__main__":
    key = jax.random.PRNGKey(0)
    k_img, k_par = jax.random.split(key)
    images = jax.random.uniform(k_img, (N_BATCH,) + CHW, jnp.float32)  # NCHW
    params = init_params(k_par)
    packed = pack_params(params)

    out = vit_forward(images, packed)
    out = jax.block_until_ready(out)

    assert out.shape == (N_BATCH, OUT_D)
    # rows of the final (exact) softmax must sum to 1
    assert bool(jnp.all(jnp.abs(jnp.sum(out, axis=-1) - 1.0) < 1e-4))
    # agree with the pure-JAX reference (approx reciprocal in attention + tanh GELU
    # are the only intentional numeric deviations; both far below this tolerance)
    ref = vit_reference(images, params)
    assert bool(jnp.max(jnp.abs(out - ref)) < 2e-2)
    print("KERNEL_OK")
</pallas_src>

<mosaic_0001>
module attributes {stable_mosaic.version = 11 : i64} {
  func.func @vit_kernel(%arg0: i32, %arg1: memref<1x34x16xf32, #tpu.memory_space<vmem>>, %arg2: memref<88x128xf32, #tpu.memory_space<vmem>>, %arg3: memref<16x8xf32, #tpu.memory_space<vmem>>, %arg4: memref<2x8x24xf32, #tpu.memory_space<vmem>>, %arg5: memref<2x8x32xf32, #tpu.memory_space<vmem>>, %arg6: memref<2x32x8xf32, #tpu.memory_space<vmem>>, %arg7: memref<8x128xf32, #tpu.memory_space<vmem>>, %arg8: memref<2x128xf32, #tpu.memory_space<vmem>>) attributes {dimension_semantics = [#tpu.dimension_semantics<parallel>], iteration_bounds = array<i64: 1>, scalar_prefetch = 0 : i64, scratch_operands = 0 : i64, tpu.core_type = #tpu.core_type<tc>, window_params = [{transform_indices = @transform_0, window_bounds = array<i64: 1, 34, 16>}, {pipeline_mode = #tpu.pipeline_mode<synchronous>, transform_indices = @transform_1, window_bounds = array<i64: 88, 128>}, {pipeline_mode = #tpu.pipeline_mode<synchronous>, transform_indices = @transform_2, window_bounds = array<i64: 16, 8>}, {pipeline_mode = #tpu.pipeline_mode<synchronous>, transform_indices = @transform_3, window_bounds = array<i64: 2, 8, 24>}, {pipeline_mode = #tpu.pipeline_mode<synchronous>, transform_indices = @transform_4, window_bounds = array<i64: 2, 8, 32>}, {pipeline_mode = #tpu.pipeline_mode<synchronous>, transform_indices = @transform_5, window_bounds = array<i64: 2, 32, 8>}, {pipeline_mode = #tpu.pipeline_mode<synchronous>, transform_indices = @transform_6, window_bounds = array<i64: 8, 128>}, {transform_indices = @transform_7, window_bounds = array<i64: 2, 128>}]} {
    %0 = tpu.iota {dimensions = array<i32: 1>} : vector<1x8xi32>
    %c0_i32 = arith.constant 0 : i32
    %1 = vector.broadcast %c0_i32 : i32 to vector<1x8xi32>
    %2 = arith.cmpi sge, %0, %1 : vector<1x8xi32>
    %c4_i32 = arith.constant 4 : i32
    %3 = vector.broadcast %c4_i32 : i32 to vector<1x8xi32>
    %4 = arith.cmpi slt, %0, %3 : vector<1x8xi32>
    %5 = arith.andi %2, %4 : vector<1x8xi1>
    %6 = arith.extui %5 : vector<1x8xi1> to vector<1x8xi32>
    %7 = arith.sitofp %6 : vector<1x8xi32> to vector<1x8xf32>
    %c4_i32_0 = arith.constant 4 : i32
    %8 = vector.broadcast %c4_i32_0 : i32 to vector<1x8xi32>
    %9 = arith.cmpi sge, %0, %8 : vector<1x8xi32>
    %c8_i32 = arith.constant 8 : i32
    %10 = vector.broadcast %c8_i32 : i32 to vector<1x8xi32>
    %11 = arith.cmpi slt, %0, %10 : vector<1x8xi32>
    %12 = arith.andi %9, %11 : vector<1x8xi1>
    %13 = arith.extui %12 : vector<1x8xi1> to vector<1x8xi32>
    %14 = arith.sitofp %13 : vector<1x8xi32> to vector<1x8xf32>
    %c49 = arith.constant 49 : index
    %c0 = arith.constant 0 : index
    %15 = vector.load %arg2[%c49, %c0] : memref<88x128xf32, #tpu.memory_space<vmem>>, vector<34x34xf32>
    %c0_1 = arith.constant 0 : index
    %c0_2 = arith.constant 0 : index
    %c0_3 = arith.constant 0 : index
    %16 = vector.load %arg1[%c0_1, %c0_2, %c0_3] : memref<1x34x16xf32, #tpu.memory_space<vmem>>, vector<1x34x16xf32>
    %17 = vector.shape_cast %16 : vector<1x34x16xf32> to vector<34x16xf32>
    %c0_4 = arith.constant 0 : index
    %c0_5 = arith.constant 0 : index
    %18 = vector.load %arg3[%c0_4, %c0_5] : memref<16x8xf32, #tpu.memory_space<vmem>>, vector<16x8xf32>
    %cst = arith.constant dense<0.000000e+00> : vector<34x8xf32>
    %19 = tpu.matmul %17, %18, %cst {dimension_numbers = #tpu.dot_dimension_numbers<[1], [0], [0], [1], [0, 0, 1, 1], [], []>} : vector<34x16xf32>, vector<16x8xf32>, vector<34x8xf32> -> vector<34x8xf32>
    %c0_6 = arith.constant 0 : index
    %c0_7 = arith.constant 0 : index
    %20 = vector.load %arg2[%c0_6, %c0_7] : memref<88x128xf32, #tpu.memory_space<vmem>>, vector<34x8xf32>
    %21 = arith.addf %19, %20 : vector<34x8xf32>
    %c34 = arith.constant 34 : index
    %c0_8 = arith.constant 0 : index
    %22 = vector.load %arg2[%c34, %c0_8] : memref<88x128xf32, #tpu.memory_space<vmem>>, vector<1x8xf32>
    %c35 = arith.constant 35 : index
    %c0_9 = arith.constant 0 : index
    %23 = vector.load %arg2[%c35, %c0_9] : memref<88x128xf32, #tpu.memory_space<vmem>>, vector<1x8xf32>
    %cst_10 = arith.constant dense<0.000000e+00> : vector<34xf32>
    %24 = vector.multi_reduction <add>, %21, %cst_10 [1] : vector<34x8xf32> to vector<34xf32>
    %25 = vector.shape_cast %24 : vector<34xf32> to vector<34x1xf32>
    %cst_11 = arith.constant 8.000000e+00 : f32
    %26 = vector.broadcast %cst_11 : f32 to vector<34x1xf32>
    %27 = arith.divf %25, %26 : vector<34x1xf32>
    %28 = vector.broadcast %27 : vector<34x1xf32> to vector<34x8xf32>
    %29 = arith.subf %21, %28 : vector<34x8xf32>
    %30 = arith.mulf %29, %29 : vector<34x8xf32>
    %cst_12 = arith.constant dense<0.000000e+00> : vector<34xf32>
    %31 = vector.multi_reduction <add>, %30, %cst_12 [1] : vector<34x8xf32> to vector<34xf32>
    %32 = vector.shape_cast %31 : vector<34xf32> to vector<34x1xf32>
    %cst_13 = arith.constant 8.000000e+00 : f32
    %33 = vector.broadcast %cst_13 : f32 to vector<34x1xf32>
    %34 = arith.divf %32, %33 : vector<34x1xf32>
    %35 = vector.broadcast %27 : vector<34x1xf32> to vector<34x8xf32>
    %36 = arith.subf %21, %35 : vector<34x8xf32>
    %cst_14 = arith.constant 9.99999974E-6 : f32
    %37 = vector.broadcast %cst_14 : f32 to vector<34x1xf32>
    %38 = arith.addf %34, %37 : vector<34x1xf32>
    %39 = math.rsqrt %38 : vector<34x1xf32>
    %40 = vector.broadcast %39 : vector<34x1xf32> to vector<34x8xf32>
    %41 = arith.mulf %36, %40 : vector<34x8xf32>
    %42 = vector.broadcast %22 : vector<1x8xf32> to vector<34x8xf32>
    %43 = arith.mulf %41, %42 : vector<34x8xf32>
    %44 = vector.broadcast %23 : vector<1x8xf32> to vector<34x8xf32>
    %45 = arith.addf %43, %44 : vector<34x8xf32>
    %c0_15 = arith.constant 0 : index
    %c0_16 = arith.constant 0 : index
    %c0_17 = arith.constant 0 : index
    %46 = vector.load %arg4[%c0_15, %c0_16, %c0_17] : memref<2x8x24xf32, #tpu.memory_space<vmem>>, vector<1x8x24xf32>
    %47 = vector.shape_cast %46 : vector<1x8x24xf32> to vector<8x24xf32>
    %cst_18 = arith.constant dense<0.000000e+00> : vector<34x24xf32>
    %48 = tpu.matmul %45, %47, %cst_18 {dimension_numbers = #tpu.dot_dimension_numbers<[1], [0], [0], [1], [0, 0, 1, 1], [], []>} : vector<34x8xf32>, vector<8x24xf32>, vector<34x24xf32> -> vector<34x24xf32>
    %c42 = arith.constant 42 : index
    %c0_19 = arith.constant 0 : index
    %49 = vector.load %arg2[%c42, %c0_19] : memref<88x128xf32, #tpu.memory_space<vmem>>, vector<1x24xf32>
    %50 = vector.broadcast %49 : vector<1x24xf32> to vector<34x24xf32>
    %51 = arith.addf %48, %50 : vector<34x24xf32>
    %52 = vector.extract_strided_slice %51 {offsets = [0, 0], sizes = [34, 8], strides = [1, 1]} : vector<34x24xf32> to vector<34x8xf32>
    %53 = vector.extract_strided_slice %51 {offsets = [0, 8], sizes = [34, 8], strides = [1, 1]} : vector<34x24xf32> to vector<34x8xf32>
    %54 = vector.extract_strided_slice %51 {offsets = [0, 16], sizes = [34, 8], strides = [1, 1]} : vector<34x24xf32> to vector<34x8xf32>
    %cst_20 = arith.constant 0.000000e+00 : f32
    %55 = vector.broadcast %cst_20 : f32 to vector<34x8xf32>
    %56 = vector.broadcast %7 : vector<1x8xf32> to vector<34x8xf32>
    %57 = arith.mulf %52, %56 : vector<34x8xf32>
    %cst_21 = arith.constant dense<0.000000e+00> : vector<34x34xf32>
    %58 = tpu.matmul %57, %53, %cst_21 {dimension_numbers = #tpu.dot_dimension_numbers<[1], [1], [0], [0], [0, 0, 1, 0], [], []>} : vector<34x8xf32>, vector<34x8xf32>, vector<34x34xf32> -> vector<34x34xf32>
    %59 = arith.addf %58, %15 : vector<34x34xf32>
    %cst_22 = arith.constant dense<0xFF800000> : vector<34xf32>
    %60 = vector.multi_reduction <maximumf>, %59, %cst_22 [1] : vector<34x34xf32> to vector<34xf32>
    %61 = vector.shape_cast %60 : vector<34xf32> to vector<34x1xf32>
    %62 = vector.broadcast %61 : vector<34x1xf32> to vector<34x34xf32>
    %63 = arith.subf %59, %62 : vector<34x34xf32>
    %64 = math.exp %63 : vector<34x34xf32>
    %cst_23 = arith.constant dense<0.000000e+00> : vector<34xf32>
    %65 = vector.multi_reduction <add>, %64, %cst_23 [1] : vector<34x34xf32> to vector<34xf32>
    %66 = vector.shape_cast %65 : vector<34xf32> to vector<34x1xf32>
    %67 = tpu.reciprocal %66 {approx = true} : vector<34x1xf32> -> vector<34x1xf32>
    %68 = vector.broadcast %67 : vector<34x1xf32> to vector<34x34xf32>
    %69 = arith.mulf %64, %68 : vector<34x34xf32>
    %70 = vector.broadcast %7 : vector<1x8xf32> to vector<34x8xf32>
    %71 = arith.mulf %54, %70 : vector<34x8xf32>
    %cst_24 = arith.constant dense<0.000000e+00> : vector<34x8xf32>
    %72 = tpu.matmul %69, %71, %cst_24 {dimension_numbers = #tpu.dot_dimension_numbers<[1], [0], [0], [1], [0, 0, 1, 1], [], []>} : vector<34x34xf32>, vector<34x8xf32>, vector<34x8xf32> -> vector<34x8xf32>
    %73 = arith.addf %55, %72 : vector<34x8xf32>
    %74 = vector.broadcast %14 : vector<1x8xf32> to vector<34x8xf32>
    %75 = arith.mulf %52, %74 : vector<34x8xf32>
    %cst_25 = arith.constant dense<0.000000e+00> : vector<34x34xf32>
    %76 = tpu.matmul %75, %53, %cst_25 {dimension_numbers = #tpu.dot_dimension_numbers<[1], [1], [0], [0], [0, 0, 1, 0], [], []>} : vector<34x8xf32>, vector<34x8xf32>, vector<34x34xf32> -> vector<34x34xf32>
    %77 = arith.addf %76, %15 : vector<34x34xf32>
    %cst_26 = arith.constant dense<0xFF800000> : vector<34xf32>
    %78 = vector.multi_reduction <maximumf>, %77, %cst_26 [1] : vector<34x34xf32> to vector<34xf32>
    %79 = vector.shape_cast %78 : vector<34xf32> to vector<34x1xf32>
    %80 = vector.broadcast %79 : vector<34x1xf32> to vector<34x34xf32>
    %81 = arith.subf %77, %80 : vector<34x34xf32>
    %82 = math.exp %81 : vector<34x34xf32>
    %cst_27 = arith.constant dense<0.000000e+00> : vector<34xf32>
    %83 = vector.multi_reduction <add>, %82, %cst_27 [1] : vector<34x34xf32> to vector<34xf32>
    %84 = vector.shape_cast %83 : vector<34xf32> to vector<34x1xf32>
    %85 = tpu.reciprocal %84 {approx = true} : vector<34x1xf32> -> vector<34x1xf32>
    %86 = vector.broadcast %85 : vector<34x1xf32> to vector<34x34xf32>
    %87 = arith.mulf %82, %86 : vector<34x34xf32>
    %88 = vector.broadcast %14 : vector<1x8xf32> to vector<34x8xf32>
    %89 = arith.mulf %54, %88 : vector<34x8xf32>
    %cst_28 = arith.constant dense<0.000000e+00> : vector<34x8xf32>
    %90 = tpu.matmul %87, %89, %cst_28 {dimension_numbers = #tpu.dot_dimension_numbers<[1], [0], [0], [1], [0, 0, 1, 1], [], []>} : vector<34x34xf32>, vector<34x8xf32>, vector<34x8xf32> -> vector<34x8xf32>
    %91 = arith.addf %73, %90 : vector<34x8xf32>
    %92 = arith.addf %21, %91 : vector<34x8xf32>
    %c36 = arith.constant 36 : index
    %c0_29 = arith.constant 0 : index
    %93 = vector.load %arg2[%c36, %c0_29] : memref<88x128xf32, #tpu.memory_space<vmem>>, vector<1x8xf32>
    %c37 = arith.constant 37 : index
    %c0_30 = arith.constant 0 : index
    %94 = vector.load %arg2[%c37, %c0_30] : memref<88x128xf32, #tpu.memory_space<vmem>>, vector<1x8xf32>
    %cst_31 = arith.constant dense<0.000000e+00> : vector<34xf32>
    %95 = vector.multi_reduction <add>, %92, %cst_31 [1] : vector<34x8xf32> to vector<34xf32>
    %96 = vector.shape_cast %95 : vector<34xf32> to vector<34x1xf32>
    %cst_32 = arith.constant 8.000000e+00 : f32
    %97 = vector.broadcast %cst_32 : f32 to vector<34x1xf32>
    %98 = arith.divf %96, %97 : vector<34x1xf32>
    %99 = vector.broadcast %98 : vector<34x1xf32> to vector<34x8xf32>
    %100 = arith.subf %92, %99 : vector<34x8xf32>
    %101 = arith.mulf %100, %100 : vector<34x8xf32>
    %cst_33 = arith.constant dense<0.000000e+00> : vector<34xf32>
    %102 = vector.multi_reduction <add>, %101, %cst_33 [1] : vector<34x8xf32> to vector<34xf32>
    %103 = vector.shape_cast %102 : vector<34xf32> to vector<34x1xf32>
    %cst_34 = arith.constant 8.000000e+00 : f32
    %104 = vector.broadcast %cst_34 : f32 to vector<34x1xf32>
    %105 = arith.divf %103, %104 : vector<34x1xf32>
    %106 = vector.broadcast %98 : vector<34x1xf32> to vector<34x8xf32>
    %107 = arith.subf %92, %106 : vector<34x8xf32>
    %cst_35 = arith.constant 9.99999974E-6 : f32
    %108 = vector.broadcast %cst_35 : f32 to vector<34x1xf32>
    %109 = arith.addf %105, %108 : vector<34x1xf32>
    %110 = math.rsqrt %109 : vector<34x1xf32>
    %111 = vector.broadcast %110 : vector<34x1xf32> to vector<34x8xf32>
    %112 = arith.mulf %107, %111 : vector<34x8xf32>
    %113 = vector.broadcast %93 : vector<1x8xf32> to vector<34x8xf32>
    %114 = arith.mulf %112, %113 : vector<34x8xf32>
    %115 = vector.broadcast %94 : vector<1x8xf32> to vector<34x8xf32>
    %116 = arith.addf %114, %115 : vector<34x8xf32>
    %c0_36 = arith.constant 0 : index
    %c0_37 = arith.constant 0 : index
    %c0_38 = arith.constant 0 : index
    %117 = vector.load %arg5[%c0_36, %c0_37, %c0_38] : memref<2x8x32xf32, #tpu.memory_space<vmem>>, vector<1x8x32xf32>
    %118 = vector.shape_cast %117 : vector<1x8x32xf32> to vector<8x32xf32>
    %cst_39 = arith.constant dense<0.000000e+00> : vector<34x32xf32>
    %119 = tpu.matmul %116, %118, %cst_39 {dimension_numbers = #tpu.dot_dimension_numbers<[1], [0], [0], [1], [0, 0, 1, 1], [], []>} : vector<34x8xf32>, vector<8x32xf32>, vector<34x32xf32> -> vector<34x32xf32>
    %c44 = arith.constant 44 : index
    %c0_40 = arith.constant 0 : index
    %120 = vector.load %arg2[%c44, %c0_40] : memref<88x128xf32, #tpu.memory_space<vmem>>, vector<1x32xf32>
    %121 = vector.broadcast %120 : vector<1x32xf32> to vector<34x32xf32>
    %122 = arith.addf %119, %121 : vector<34x32xf32>
    %123 = arith.mulf %122, %122 : vector<34x32xf32>
    %124 = arith.mulf %122, %123 : vector<34x32xf32>
    %cst_41 = arith.constant 4.471500e-02 : f32
    %125 = vector.broadcast %cst_41 : f32 to vector<34x32xf32>
    %126 = arith.mulf %125, %124 : vector<34x32xf32>
    %127 = arith.addf %122, %126 : vector<34x32xf32>
    %cst_42 = arith.constant 0.797884583 : f32
    %128 = vector.broadcast %cst_42 : f32 to vector<34x32xf32>
    %129 = arith.mulf %128, %127 : vector<34x32xf32>
    %130 = math.tanh %129 : vector<34x32xf32>
    %cst_43 = arith.constant 1.000000e+00 : f32
    %131 = vector.broadcast %cst_43 : f32 to vector<34x32xf32>
    %132 = arith.addf %131, %130 : vector<34x32xf32>
    %cst_44 = arith.constant 5.000000e-01 : f32
    %133 = vector.broadcast %cst_44 : f32 to vector<34x32xf32>
    %134 = arith.mulf %133, %132 : vector<34x32xf32>
    %135 = arith.mulf %122, %134 : vector<34x32xf32>
    %c0_45 = arith.constant 0 : index
    %c0_46 = arith.constant 0 : index
    %c0_47 = arith.constant 0 : index
    %136 = vector.load %arg6[%c0_45, %c0_46, %c0_47] : memref<2x32x8xf32, #tpu.memory_space<vmem>>, vector<1x32x8xf32>
    %137 = vector.shape_cast %136 : vector<1x32x8xf32> to vector<32x8xf32>
    %cst_48 = arith.constant dense<0.000000e+00> : vector<34x8xf32>
    %138 = tpu.matmul %135, %137, %cst_48 {dimension_numbers = #tpu.dot_dimension_numbers<[1], [0], [0], [1], [0, 0, 1, 1], [], []>} : vector<34x32xf32>, vector<32x8xf32>, vector<34x8xf32> -> vector<34x8xf32>
    %139 = arith.addf %92, %138 : vector<34x8xf32>
    %c46 = arith.constant 46 : index
    %c0_49 = arith.constant 0 : index
    %140 = vector.load %arg2[%c46, %c0_49] : memref<88x128xf32, #tpu.memory_space<vmem>>, vector<1x8xf32>
    %141 = vector.broadcast %140 : vector<1x8xf32> to vector<34x8xf32>
    %142 = arith.addf %139, %141 : vector<34x8xf32>
    %c38 = arith.constant 38 : index
    %c0_50 = arith.constant 0 : index
    %143 = vector.load %arg2[%c38, %c0_50] : memref<88x128xf32, #tpu.memory_space<vmem>>, vector<1x8xf32>
    %c39 = arith.constant 39 : index
    %c0_51 = arith.constant 0 : index
    %144 = vector.load %arg2[%c39, %c0_51] : memref<88x128xf32, #tpu.memory_space<vmem>>, vector<1x8xf32>
    %cst_52 = arith.constant dense<0.000000e+00> : vector<34xf32>
    %145 = vector.multi_reduction <add>, %142, %cst_52 [1] : vector<34x8xf32> to vector<34xf32>
    %146 = vector.shape_cast %145 : vector<34xf32> to vector<34x1xf32>
    %cst_53 = arith.constant 8.000000e+00 : f32
    %147 = vector.broadcast %cst_53 : f32 to vector<34x1xf32>
    %148 = arith.divf %146, %147 : vector<34x1xf32>
    %149 = vector.broadcast %148 : vector<34x1xf32> to vector<34x8xf32>
    %150 = arith.subf %142, %149 : vector<34x8xf32>
    %151 = arith.mulf %150, %150 : vector<34x8xf32>
    %cst_54 = arith.constant dense<0.000000e+00> : vector<34xf32>
    %152 = vector.multi_reduction <add>, %151, %cst_54 [1] : vector<34x8xf32> to vector<34xf32>
    %153 = vector.shape_cast %152 : vector<34xf32> to vector<34x1xf32>
    %cst_55 = arith.constant 8.000000e+00 : f32
    %154 = vector.broadcast %cst_55 : f32 to vector<34x1xf32>
    %155 = arith.divf %153, %154 : vector<34x1xf32>
    %156 = vector.broadcast %148 : vector<34x1xf32> to vector<34x8xf32>
    %157 = arith.subf %142, %156 : vector<34x8xf32>
    %cst_56 = arith.constant 9.99999974E-6 : f32
    %158 = vector.broadcast %cst_56 : f32 to vector<34x1xf32>
    %159 = arith.addf %155, %158 : vector<34x1xf32>
    %160 = math.rsqrt %159 : vector<34x1xf32>
    %161 = vector.broadcast %160 : vector<34x1xf32> to vector<34x8xf32>
    %162 = arith.mulf %157, %161 : vector<34x8xf32>
    %163 = vector.broadcast %143 : vector<1x8xf32> to vector<34x8xf32>
    %164 = arith.mulf %162, %163 : vector<34x8xf32>
    %165 = vector.broadcast %144 : vector<1x8xf32> to vector<34x8xf32>
    %166 = arith.addf %164, %165 : vector<34x8xf32>
    %c1 = arith.constant 1 : index
    %c0_57 = arith.constant 0 : index
    %c0_58 = arith.constant 0 : index
    %167 = vector.load %arg4[%c1, %c0_57, %c0_58] : memref<2x8x24xf32, #tpu.memory_space<vmem>>, vector<1x8x24xf32>
    %168 = vector.shape_cast %167 : vector<1x8x24xf32> to vector<8x24xf32>
    %cst_59 = arith.constant dense<0.000000e+00> : vector<34x24xf32>
    %169 = tpu.matmul %166, %168, %cst_59 {dimension_numbers = #tpu.dot_dimension_numbers<[1], [0], [0], [1], [0, 0, 1, 1], [], []>} : vector<34x8xf32>, vector<8x24xf32>, vector<34x24xf32> -> vector<34x24xf32>
    %c43 = arith.constant 43 : index
    %c0_60 = arith.constant 0 : index
    %170 = vector.load %arg2[%c43, %c0_60] : memref<88x128xf32, #tpu.memory_space<vmem>>, vector<1x24xf32>
    %171 = vector.broadcast %170 : vector<1x24xf32> to vector<34x24xf32>
    %172 = arith.addf %169, %171 : vector<34x24xf32>
    %173 = vector.extract_strided_slice %172 {offsets = [0, 0], sizes = [34, 8], strides = [1, 1]} : vector<34x24xf32> to vector<34x8xf32>
    %174 = vector.extract_strided_slice %172 {offsets = [0, 8], sizes = [34, 8], strides = [1, 1]} : vector<34x24xf32> to vector<34x8xf32>
    %175 = vector.extract_strided_slice %172 {offsets = [0, 16], sizes = [34, 8], strides = [1, 1]} : vector<34x24xf32> to vector<34x8xf32>
    %cst_61 = arith.constant 0.000000e+00 : f32
    %176 = vector.broadcast %cst_61 : f32 to vector<34x8xf32>
    %177 = vector.broadcast %7 : vector<1x8xf32> to vector<34x8xf32>
    %178 = arith.mulf %173, %177 : vector<34x8xf32>
    %cst_62 = arith.constant dense<0.000000e+00> : vector<34x34xf32>
    %179 = tpu.matmul %178, %174, %cst_62 {dimension_numbers = #tpu.dot_dimension_numbers<[1], [1], [0], [0], [0, 0, 1, 0], [], []>} : vector<34x8xf32>, vector<34x8xf32>, vector<34x34xf32> -> vector<34x34xf32>
    %180 = arith.addf %179, %15 : vector<34x34xf32>
    %cst_63 = arith.constant dense<0xFF800000> : vector<34xf32>
    %181 = vector.multi_reduction <maximumf>, %180, %cst_63 [1] : vector<34x34xf32> to vector<34xf32>
    %182 = vector.shape_cast %181 : vector<34xf32> to vector<34x1xf32>
    %183 = vector.broadcast %182 : vector<34x1xf32> to vector<34x34xf32>
    %184 = arith.subf %180, %183 : vector<34x34xf32>
    %185 = math.exp %184 : vector<34x34xf32>
    %cst_64 = arith.constant dense<0.000000e+00> : vector<34xf32>
    %186 = vector.multi_reduction <add>, %185, %cst_64 [1] : vector<34x34xf32> to vector<34xf32>
    %187 = vector.shape_cast %186 : vector<34xf32> to vector<34x1xf32>
    %188 = tpu.reciprocal %187 {approx = true} : vector<34x1xf32> -> vector<34x1xf32>
    %189 = vector.broadcast %188 : vector<34x1xf32> to vector<34x34xf32>
    %190 = arith.mulf %185, %189 : vector<34x34xf32>
    %191 = vector.broadcast %7 : vector<1x8xf32> to vector<34x8xf32>
    %192 = arith.mulf %175, %191 : vector<34x8xf32>
    %cst_65 = arith.constant dense<0.000000e+00> : vector<34x8xf32>
    %193 = tpu.matmul %190, %192, %cst_65 {dimension_numbers = #tpu.dot_dimension_numbers<[1], [0], [0], [1], [0, 0, 1, 1], [], []>} : vector<34x34xf32>, vector<34x8xf32>, vector<34x8xf32> -> vector<34x8xf32>
    %194 = arith.addf %176, %193 : vector<34x8xf32>
    %195 = vector.broadcast %14 : vector<1x8xf32> to vector<34x8xf32>
    %196 = arith.mulf %173, %195 : vector<34x8xf32>
    %cst_66 = arith.constant dense<0.000000e+00> : vector<34x34xf32>
    %197 = tpu.matmul %196, %174, %cst_66 {dimension_numbers = #tpu.dot_dimension_numbers<[1], [1], [0], [0], [0, 0, 1, 0], [], []>} : vector<34x8xf32>, vector<34x8xf32>, vector<34x34xf32> -> vector<34x34xf32>
    %198 = arith.addf %197, %15 : vector<34x34xf32>
    %cst_67 = arith.constant dense<0xFF800000> : vector<34xf32>
    %199 = vector.multi_reduction <maximumf>, %198, %cst_67 [1] : vector<34x34xf32> to vector<34xf32>
    %200 = vector.shape_cast %199 : vector<34xf32> to vector<34x1xf32>
    %201 = vector.broadcast %200 : vector<34x1xf32> to vector<34x34xf32>
    %202 = arith.subf %198, %201 : vector<34x34xf32>
    %203 = math.exp %202 : vector<34x34xf32>
    %cst_68 = arith.constant dense<0.000000e+00> : vector<34xf32>
    %204 = vector.multi_reduction <add>, %203, %cst_68 [1] : vector<34x34xf32> to vector<34xf32>
    %205 = vector.shape_cast %204 : vector<34xf32> to vector<34x1xf32>
    %206 = tpu.reciprocal %205 {approx = true} : vector<34x1xf32> -> vector<34x1xf32>
    %207 = vector.broadcast %206 : vector<34x1xf32> to vector<34x34xf32>
    %208 = arith.mulf %203, %207 : vector<34x34xf32>
    %209 = vector.broadcast %14 : vector<1x8xf32> to vector<34x8xf32>
    %210 = arith.mulf %175, %209 : vector<34x8xf32>
    %cst_69 = arith.constant dense<0.000000e+00> : vector<34x8xf32>
    %211 = tpu.matmul %208, %210, %cst_69 {dimension_numbers = #tpu.dot_dimension_numbers<[1], [0], [0], [1], [0, 0, 1, 1], [], []>} : vector<34x34xf32>, vector<34x8xf32>, vector<34x8xf32> -> vector<34x8xf32>
    %212 = arith.addf %194, %211 : vector<34x8xf32>
    %213 = arith.addf %142, %212 : vector<34x8xf32>
    %c40 = arith.constant 40 : index
    %c0_70 = arith.constant 0 : index
    %214 = vector.load %arg2[%c40, %c0_70] : memref<88x128xf32, #tpu.memory_space<vmem>>, vector<1x8xf32>
    %c41 = arith.constant 41 : index
    %c0_71 = arith.constant 0 : index
    %215 = vector.load %arg2[%c41, %c0_71] : memref<88x128xf32, #tpu.memory_space<vmem>>, vector<1x8xf32>
    %cst_72 = arith.constant dense<0.000000e+00> : vector<34xf32>
    %216 = vector.multi_reduction <add>, %213, %cst_72 [1] : vector<34x8xf32> to vector<34xf32>
    %217 = vector.shape_cast %216 : vector<34xf32> to vector<34x1xf32>
    %cst_73 = arith.constant 8.000000e+00 : f32
    %218 = vector.broadcast %cst_73 : f32 to vector<34x1xf32>
    %219 = arith.divf %217, %218 : vector<34x1xf32>
    %220 = vector.broadcast %219 : vector<34x1xf32> to vector<34x8xf32>
    %221 = arith.subf %213, %220 : vector<34x8xf32>
    %222 = arith.mulf %221, %221 : vector<34x8xf32>
    %cst_74 = arith.constant dense<0.000000e+00> : vector<34xf32>
    %223 = vector.multi_reduction <add>, %222, %cst_74 [1] : vector<34x8xf32> to vector<34xf32>
    %224 = vector.shape_cast %223 : vector<34xf32> to vector<34x1xf32>
    %cst_75 = arith.constant 8.000000e+00 : f32
    %225 = vector.broadcast %cst_75 : f32 to vector<34x1xf32>
    %226 = arith.divf %224, %225 : vector<34x1xf32>
    %227 = vector.broadcast %219 : vector<34x1xf32> to vector<34x8xf32>
    %228 = arith.subf %213, %227 : vector<34x8xf32>
    %cst_76 = arith.constant 9.99999974E-6 : f32
    %229 = vector.broadcast %cst_76 : f32 to vector<34x1xf32>
    %230 = arith.addf %226, %229 : vector<34x1xf32>
    %231 = math.rsqrt %230 : vector<34x1xf32>
    %232 = vector.broadcast %231 : vector<34x1xf32> to vector<34x8xf32>
    %233 = arith.mulf %228, %232 : vector<34x8xf32>
    %234 = vector.broadcast %214 : vector<1x8xf32> to vector<34x8xf32>
    %235 = arith.mulf %233, %234 : vector<34x8xf32>
    %236 = vector.broadcast %215 : vector<1x8xf32> to vector<34x8xf32>
    %237 = arith.addf %235, %236 : vector<34x8xf32>
    %c1_77 = arith.constant 1 : index
    %c0_78 = arith.constant 0 : index
    %c0_79 = arith.constant 0 : index
    %238 = vector.load %arg5[%c1_77, %c0_78, %c0_79] : memref<2x8x32xf32, #tpu.memory_space<vmem>>, vector<1x8x32xf32>
    %239 = vector.shape_cast %238 : vector<1x8x32xf32> to vector<8x32xf32>
    %cst_80 = arith.constant dense<0.000000e+00> : vector<34x32xf32>
    %240 = tpu.matmul %237, %239, %cst_80 {dimension_numbers = #tpu.dot_dimension_numbers<[1], [0], [0], [1], [0, 0, 1, 1], [], []>} : vector<34x8xf32>, vector<8x32xf32>, vector<34x32xf32> -> vector<34x32xf32>
    %c45 = arith.constant 45 : index
    %c0_81 = arith.constant 0 : index
    %241 = vector.load %arg2[%c45, %c0_81] : memref<88x128xf32, #tpu.memory_space<vmem>>, vector<1x32xf32>
    %242 = vector.broadcast %241 : vector<1x32xf32> to vector<34x32xf32>
    %243 = arith.addf %240, %242 : vector<34x32xf32>
    %244 = arith.mulf %243, %243 : vector<34x32xf32>
    %245 = arith.mulf %243, %244 : vector<34x32xf32>
    %cst_82 = arith.constant 4.471500e-02 : f32
    %246 = vector.broadcast %cst_82 : f32 to vector<34x32xf32>
    %247 = arith.mulf %246, %245 : vector<34x32xf32>
    %248 = arith.addf %243, %247 : vector<34x32xf32>
    %cst_83 = arith.constant 0.797884583 : f32
    %249 = vector.broadcast %cst_83 : f32 to vector<34x32xf32>
    %250 = arith.mulf %249, %248 : vector<34x32xf32>
    %251 = math.tanh %250 : vector<34x32xf32>
    %cst_84 = arith.constant 1.000000e+00 : f32
    %252 = vector.broadcast %cst_84 : f32 to vector<34x32xf32>
    %253 = arith.addf %252, %251 : vector<34x32xf32>
    %cst_85 = arith.constant 5.000000e-01 : f32
    %254 = vector.broadcast %cst_85 : f32 to vector<34x32xf32>
    %255 = arith.mulf %254, %253 : vector<34x32xf32>
    %256 = arith.mulf %243, %255 : vector<34x32xf32>
    %c1_86 = arith.constant 1 : index
    %c0_87 = arith.constant 0 : index
    %c0_88 = arith.constant 0 : index
    %257 = vector.load %arg6[%c1_86, %c0_87, %c0_88] : memref<2x32x8xf32, #tpu.memory_space<vmem>>, vector<1x32x8xf32>
    %258 = vector.shape_cast %257 : vector<1x32x8xf32> to vector<32x8xf32>
    %cst_89 = arith.constant dense<0.000000e+00> : vector<34x8xf32>
    %259 = tpu.matmul %256, %258, %cst_89 {dimension_numbers = #tpu.dot_dimension_numbers<[1], [0], [0], [1], [0, 0, 1, 1], [], []>} : vector<34x32xf32>, vector<32x8xf32>, vector<34x8xf32> -> vector<34x8xf32>
    %260 = arith.addf %213, %259 : vector<34x8xf32>
    %c47 = arith.constant 47 : index
    %c0_90 = arith.constant 0 : index
    %261 = vector.load %arg2[%c47, %c0_90] : memref<88x128xf32, #tpu.memory_space<vmem>>, vector<1x8xf32>
    %262 = vector.broadcast %261 : vector<1x8xf32> to vector<34x8xf32>
    %263 = arith.addf %260, %262 : vector<34x8xf32>
    %264 = tpu.iota {dimensions = array<i32: 1>} : vector<2x34xi32>
    %265 = tpu.iota {dimensions = array<i32: 0>} : vector<2x34xi32>
    %c17_i32 = arith.constant 17 : i32
    %266 = vector.broadcast %c17_i32 : i32 to vector<2x34xi32>
    %267 = arith.muli %265, %266 : vector<2x34xi32>
    %268 = arith.cmpi eq, %264, %267 : vector<2x34xi32>
    %269 = arith.extui %268 : vector<2x34xi1> to vector<2x34xi32>
    %270 = arith.sitofp %269 : vector<2x34xi32> to vector<2x34xf32>
    %cst_91 = arith.constant dense<0.000000e+00> : vector<2x8xf32>
    %271 = tpu.matmul %270, %263, %cst_91 {dimension_numbers = #tpu.dot_dimension_numbers<[1], [0], [0], [1], [0, 0, 1, 1], [], []>} : vector<2x34xf32>, vector<34x8xf32>, vector<2x8xf32> -> vector<2x8xf32>
    %c0_92 = arith.constant 0 : index
    %c0_93 = arith.constant 0 : index
    %272 = vector.load %arg7[%c0_92, %c0_93] : memref<8x128xf32, #tpu.memory_space<vmem>>, vector<8x128xf32>
    %cst_94 = arith.constant dense<0.000000e+00> : vector<2x128xf32>
    %273 = tpu.matmul %271, %272, %cst_94 {dimension_numbers = #tpu.dot_dimension_numbers<[1], [0], [0], [1], [0, 0, 1, 1], [], []>} : vector<2x8xf32>, vector<8x128xf32>, vector<2x128xf32> -> vector<2x128xf32>
    %c48 = arith.constant 48 : index
    %c0_95 = arith.constant 0 : index
    %274 = vector.load %arg2[%c48, %c0_95] : memref<88x128xf32, #tpu.memory_space<vmem>>, vector<1x128xf32>
    %275 = vector.broadcast %274 : vector<1x128xf32> to vector<2x128xf32>
    %276 = arith.addf %273, %275 : vector<2x128xf32>
    %cst_96 = arith.constant dense<0xFF800000> : vector<2xf32>
    %277 = vector.multi_reduction <maximumf>, %276, %cst_96 [1] : vector<2x128xf32> to vector<2xf32>
    %278 = vector.shape_cast %277 : vector<2xf32> to vector<2x1xf32>
    %279 = vector.broadcast %278 : vector<2x1xf32> to vector<2x128xf32>
    %280 = arith.subf %276, %279 : vector<2x128xf32>
    %281 = math.exp %280 : vector<2x128xf32>
    %cst_97 = arith.constant dense<0.000000e+00> : vector<2xf32>
    %282 = vector.multi_reduction <add>, %281, %cst_97 [1] : vector<2x128xf32> to vector<2xf32>
    %283 = vector.shape_cast %282 : vector<2xf32> to vector<2x1xf32>
    %284 = vector.broadcast %283 : vector<2x1xf32> to vector<2x128xf32>
    %285 = arith.divf %281, %284 : vector<2x128xf32>
    %c0_98 = arith.constant 0 : index
    %c0_99 = arith.constant 0 : index
    %286 = vector.load %arg8[%c0_98, %c0_99] : memref<2x128xf32, #tpu.memory_space<vmem>>, vector<2x128xf32>
    tpu.vector_store %arg8[%c0_98, %c0_99], %285 {strides = array<i32>} : memref<2x128xf32, #tpu.memory_space<vmem>>, vector<2x128xf32>,
    return
  }
  func.func @transform_0(%arg0: i32) -> (i32, i32, i32) {
    %c0_i32 = arith.constant 0 : i32
    %c0_i32_0 = arith.constant 0 : i32
    %c0_i32_1 = arith.constant 0 : i32
    return %arg0, %c0_i32, %c0_i32_0 : i32, i32, i32
  }
  func.func @transform_1(%arg0: i32) -> (i32, i32) {
    %c0_i32 = arith.constant 0 : i32
    %c0_i32_0 = arith.constant 0 : i32
    %c0_i32_1 = arith.constant 0 : i32
    return %c0_i32, %c0_i32_0 : i32, i32
  }
  func.func @transform_2(%arg0: i32) -> (i32, i32) {
    %c0_i32 = arith.constant 0 : i32
    %c0_i32_0 = arith.constant 0 : i32
    %c0_i32_1 = arith.constant 0 : i32
    return %c0_i32, %c0_i32_0 : i32, i32
  }
  func.func @transform_3(%arg0: i32) -> (i32, i32, i32) {
    %c0_i32 = arith.constant 0 : i32
    %c0_i32_0 = arith.constant 0 : i32
    %c0_i32_1 = arith.constant 0 : i32
    %c0_i32_2 = arith.constant 0 : i32
    return %c0_i32, %c0_i32_0, %c0_i32_1 : i32, i32, i32
  }
  func.func @transform_4(%arg0: i32) -> (i32, i32, i32) {
    %c0_i32 = arith.constant 0 : i32
    %c0_i32_0 = arith.constant 0 : i32
    %c0_i32_1 = arith.constant 0 : i32
    %c0_i32_2 = arith.constant 0 : i32
    return %c0_i32, %c0_i32_0, %c0_i32_1 : i32, i32, i32
  }
  func.func @transform_5(%arg0: i32) -> (i32, i32, i32) {
    %c0_i32 = arith.constant 0 : i32
    %c0_i32_0 = arith.constant 0 : i32
    %c0_i32_1 = arith.constant 0 : i32
    %c0_i32_2 = arith.constant 0 : i32
    return %c0_i32, %c0_i32_0, %c0_i32_1 : i32, i32, i32
  }
  func.func @transform_6(%arg0: i32) -> (i32, i32) {
    %c0_i32 = arith.constant 0 : i32
    %c0_i32_0 = arith.constant 0 : i32
    %c0_i32_1 = arith.constant 0 : i32
    return %c0_i32, %c0_i32_0 : i32, i32
  }
  func.func @transform_7(%arg0: i32) -> (i32, i32) {
    %c0_i32 = arith.constant 0 : i32
    %c0_i32_0 = arith.constant 0 : i32
    return %arg0, %c0_i32 : i32, i32
  }
}

</mosaic_0001>

<llo_original>
// kernel: tpu_custom_call.1
$region0: #{tpu_custom_call.1}
  #allocation0 [shape = 'u32[]', space=smem, size = 0x4, offset = 0x4, fixed_abs, tag = 'smem constant byte address 0x4 - core index']
  #allocation1 [shape = 'u32[72,128]{1,0:T(1,128)}', space=vmem, size = 0x9000, scoped, tag = 'internal scratch']
  %s0 = inlined_call_operand.vmem [shape: f32[1,34,16], index: 0, kind: input, shape index: {}]
  %s1 = inlined_call_operand.vmem [shape: f32[88,128], index: 1, kind: input, shape index: {}]
  %s2 = inlined_call_operand.vmem [shape: f32[16,8], index: 2, kind: input, shape index: {}]
  %s3 = inlined_call_operand.vmem [shape: f32[2,8,24], index: 3, kind: input, shape index: {}]
  %s4 = inlined_call_operand.vmem [shape: f32[2,8,32], index: 4, kind: input, shape index: {}]
  %s5 = inlined_call_operand.vmem [shape: f32[2,32,8], index: 5, kind: input, shape index: {}]
  %s6 = inlined_call_operand.vmem [shape: f32[8,128], index: 6, kind: input, shape index: {}]
  %s7 = inlined_call_operand.hbm [shape: f32[2,128], index: 7, kind: output, shape index: {}]
  %s8 = sld [smem:[#allocation0]]
  $region38: #{tpu_custom_call.1} parent=0
    _
  %s10 = ssub.s32 1, %s8
  %s11 = scalar_select 0, %s10, %s8
  $region1: #{tpu_custom_call.1} parent=0
    #allocation2 [shape = 'u8[1024]{0}', space=vmem, size = 0x400, scoped, tag = 'output window, operand 0, single buffered']
    #allocation3 [shape = 's32[1]{0}', space=sflag, size = 0x4, scoped, tag = 'scoped memory for tpu_custom_call.1']
    %12 = vsyncpa [#allocation3], 0
    // Predicated region
    $region2: #{tpu_custom_call.1} parent=1 // pred_check
      _
    $region3: #{tpu_custom_call.1} parent=1 // pred_check_branch
      %14 = sbr.rel (0) target = $region5
    $region4: #{tpu_custom_call.1} parent=1 // pred_region
      _
    $region5: #{tpu_custom_call.1} parent=1 // pred_fallthru
      _
    // Predicated region
    $region6: #{tpu_custom_call.1} parent=1 // pred_check
      _
    $region7: #{tpu_custom_call.1} parent=1 // pred_check_branch
      %16 = sbr.rel (0) target = $region9
    $region8: #{tpu_custom_call.1} parent=1 // pred_region
      _
    $region9: #{tpu_custom_call.1} parent=1 // pred_fallthru
      _
    // Predicated region
    $region10: #{tpu_custom_call.1} parent=1 // pred_check
      _
    $region11: #{tpu_custom_call.1} parent=1 // pred_check_branch
      %18 = sbr.rel (0) target = $region13
    $region12: #{tpu_custom_call.1} parent=1 // pred_region
      _
    $region13: #{tpu_custom_call.1} parent=1 // pred_fallthru
      _
    // Predicated region
    $region14: #{tpu_custom_call.1} parent=1 // pred_check
      _
    $region15: #{tpu_custom_call.1} parent=1 // pred_check_branch
      %20 = sbr.rel (0) target = $region17
    $region16: #{tpu_custom_call.1} parent=1 // pred_region
      _
    $region17: #{tpu_custom_call.1} parent=1 // pred_fallthru
      _
    // Predicated region
    $region18: #{tpu_custom_call.1} parent=1 // pred_check
      _
    $region19: #{tpu_custom_call.1} parent=1 // pred_check_branch
      %22 = sbr.rel (0) target = $region21
    $region20: #{tpu_custom_call.1} parent=1 // pred_region
      _
    $region21: #{tpu_custom_call.1} parent=1 // pred_fallthru
      _
    // Predicated region
    $region22: #{tpu_custom_call.1} parent=1 // pred_check
      _
    $region23: #{tpu_custom_call.1} parent=1 // pred_check_branch
      %24 = sbr.rel (0) target = $region25
    $region24: #{tpu_custom_call.1} parent=1 // pred_region
      _
    $region25: #{tpu_custom_call.1} parent=1 // pred_fallthru
      _
    // Predicated region
    $region26: #{tpu_custom_call.1} parent=1 // pred_check
      _
    $region27: #{tpu_custom_call.1} parent=1 // pred_check_branch
      %26 = sbr.rel (0) target = $region29
    $region28: #{tpu_custom_call.1} parent=1 // pred_region
      _
    $region29: #{tpu_custom_call.1} parent=1 // pred_fallthru
      _
    %v27 = vlaneseq
    %v28 = vand.u32 %v27, 127
    %vm29 = vcmp.ge.s32.totalorder %v28, 0
    %vm30 = vcmp.lt.s32.totalorder %v28, 4
    %vm31 = vmand %vm29, %vm30
    %v32 = vsel %vm31, 1, 0
    %v33 = vcvt.s32.f32 %v32
    %vm34 = vcmp.ge.s32.totalorder %v28, 4
    %vm35 = vcmp.lt.s32.totalorder %v28, 8
    %vm36 = vmand %vm34, %vm35
    %v37 = vsel %vm36, 1, 0
    %v38 = vcvt.s32.f32 %v37
    %v39 = vld [vmem:[%s1 + $0x31] sm:$0xff]
    %v40 = vld [vmem:[%s1 + $0x39] sm:$0xff]
    %v41 = vld [vmem:[%s1 + $0x41] sm:$0xff]
    %v42 = vld [vmem:[%s1 + $0x49] sm:$0xff]
    %v43 = vld [vmem:[%s1 + $0x51] sm:$0x3]
    %v44 = vld [vmem:[%s0] sm:$0xff]
    %v45 = vld [vmem:[%s0 + $0x8] sm:$0xff]
    %v46 = vld [vmem:[%s0 + $0x10] sm:$0xff]
    %v47 = vld [vmem:[%s0 + $0x18] sm:$0xff]
    %v48 = vld [vmem:[%s0 + $0x20] sm:$0x3]
    %v49 = vld [vmem:[%s2] sm:$0xff]
    %v50 = vld [vmem:[%s2 + $0x8] sm:$0xff]
    %v51 = vld [vmem:[%s1] sm:$0xff]
    %v52 = vld [vmem:[%s1 + $0x8] sm:$0xff]
    %v53 = vld [vmem:[%s1 + $0x10] sm:$0xff]
    %v54 = vld [vmem:[%s1 + $0x18] sm:$0xff]
    %v55 = vld [vmem:[%s1 + $0x20] sm:$0x3]
    %vm56 = vcmask 130048
    %v58 = vsel %vm56, %v44, 0
    %v61 = vsel %vm56, %v45, 0
    %v64 = vsel %vm56, %v46, 0
    %v67 = vsel %vm56, %v47, 0
    %v70 = vsel %vm56, %v48, 0
    %72 = vmatpush.msra.mxu0 0.0
    %73 = vmatpush.msra.mxu0 0.0
    %74 = vmatpush.msra.mxu0 0.0
    %75 = vmatpush.msra.mxu0 0.0
    %76 = vmatpush.msra.mxu0 0.0
    %77 = vmatpush.msra.mxu0 0.0
    %78 = vmatpush.msra.mxu0 0.0
    %79 = vmatpush.msra.mxu0 0.0
    %80 = vmatpush.msra.mxu0 0.0
    %81 = vmatpush.msra.mxu0 0.0
    %82 = vmatpush.msra.mxu0 0.0
    %83 = vmatpush.msra.mxu0 0.0
    %84 = vmatpush.msra.mxu0 0.0
    %85 = vmatpush.msra.mxu0 0.0
    %86 = vmatpush.msra.mxu0 %v50
    %87 = vmatpush.msra.mxu0 %v49
    %88 = vmatmul.f32.gmra.mxu0 %v58
    %v89 = vpop.f32.mrf.mxu0
    %v90 = vadd.f32 %v51, %v89
    %91 = vmatmul.f32.gmra.mxu0 %v61
    %v92 = vpop.f32.mrf.mxu0
    %v93 = vadd.f32 %v52, %v92
    %94 = vmatmul.f32.gmra.mxu0 %v64
    %v95 = vpop.f32.mrf.mxu0
    %v96 = vadd.f32 %v53, %v95
    %97 = vmatmul.f32.gmra.mxu0 %v67
    %v98 = vpop.f32.mrf.mxu0
    %v99 = vadd.f32 %v54, %v98
    %100 = vmatmul.f32.gmra.mxu0 %v70
    %v101 = vpop.f32.mrf.mxu0
    %v102 = vadd.f32 %v55, %v101
    %103 = vdwg.mxu0
    %v104 = vld [vmem:[%s1 + $0x22] sm:$0x1]
    %v105 = vld [vmem:[%s1 + $0x23] sm:$0x1]
    %vm106 = vcmask 64512
    %v107 = vsel %vm106, %v90, 0.0
    %108 = vadd.xlane.f32.xlu0 %v107
    %v109 = vpop.xlane.xlu0 %108
    %v110 = vsel %vm106, %v93, 0.0
    %111 = vadd.xlane.f32.xlu0 %v110
    %v112 = vpop.xlane.xlu0 %111
    %v113 = vsel %vm106, %v96, 0.0
    %114 = vadd.xlane.f32.xlu0 %v113
    %v115 = vpop.xlane.xlu0 %114
    %v116 = vsel %vm106, %v99, 0.0
    %117 = vadd.xlane.f32.xlu0 %v116
    %v118 = vpop.xlane.xlu0 %117
    %vm119 = vcmask 58368
    %v120 = vsel %vm119, %v102, 0.0
    %121 = vadd.xlane.f32.xlu0 %v120
    %v122 = vpop.xlane.xlu0 %121
    %v123 = vrcp.pop 8.0
    %v124 = vmul.f32 8.0, %v123
    %v125 = vsub.f32 1.0, %v124
    %v126 = vmul.f32 %v123, %v125
    %v127 = vadd.f32 %v123, %v126
    %vm128 = vweird.f32 %v123
    %v129 = vsel %vm128, %v123, %v127
    %v130 = vmul.f32 %v109, %v129
    %v131 = vmul.f32 %v112, %v129
    %v132 = vmul.f32 %v115, %v129
    %v133 = vmul.f32 %v118, %v129
    %v134 = vmul.f32 %v122, %v129
    %v135 = vsub.f32 %v90, %v130
    %v136 = vsub.f32 %v93, %v131
    %v137 = vsub.f32 %v96, %v132
    %v138 = vsub.f32 %v99, %v133
    %v139 = vsub.f32 %v102, %v134
    %v140 = vmul.f32 %v135, %v135
    %v141 = vmul.f32 %v136, %v136
    %v142 = vmul.f32 %v137, %v137
    %v143 = vmul.f32 %v138, %v138
    %v144 = vmul.f32 %v139, %v139
    %v145 = vsel %vm106, %v140, 0.0
    %146 = vadd.xlane.f32.xlu0 %v145
    %v147 = vpop.xlane.xlu0 %146
    %v148 = vsel %vm106, %v141, 0.0
    %149 = vadd.xlane.f32.xlu0 %v148
    %v150 = vpop.xlane.xlu0 %149
    %v151 = vsel %vm106, %v142, 0.0
    %152 = vadd.xlane.f32.xlu0 %v151
    %v153 = vpop.xlane.xlu0 %152
    %v154 = vsel %vm106, %v143, 0.0
    %155 = vadd.xlane.f32.xlu0 %v154
    %v156 = vpop.xlane.xlu0 %155
    %v157 = vsel %vm119, %v144, 0.0
    %158 = vadd.xlane.f32.xlu0 %v157
    %v159 = vpop.xlane.xlu0 %158
    %v160 = vmul.f32 %v147, %v129
    %v161 = vmul.f32 %v150, %v129
    %v162 = vmul.f32 %v153, %v129
    %v163 = vmul.f32 %v156, %v129
    %v164 = vmul.f32 %v159, %v129
    %v165 = vadd.f32 %v160, 1e-05
    %v166 = vadd.f32 %v161, 1e-05
    %v167 = vadd.f32 %v162, 1e-05
    %v168 = vadd.f32 %v163, 1e-05
    %v169 = vadd.f32 %v164, 1e-05
    %v170 = vrsqrt.pop %v165
    %v171 = vmul.f32 %v170, %v165
    %v172 = vmul.f32 %v171, %v170
    %v173 = vmul.f32 0.5, %v172
    %v174 = vsub.f32 1.5, %v173
    %v175 = vmul.f32 %v170, %v174
    %vm176 = vweird.f32 %v165
    %vm177 = vweird.f32 %v170
    %vm178 = vmor %vm176, %vm177
    %v179 = vsel %vm178, %v170, %v175
    %v180 = vrsqrt.pop %v166
    %v181 = vmul.f32 %v180, %v166
    %v182 = vmul.f32 %v181, %v180
    %v183 = vmul.f32 0.5, %v182
    %v184 = vsub.f32 1.5, %v183
    %v185 = vmul.f32 %v180, %v184
    %vm186 = vweird.f32 %v166
    %vm187 = vweird.f32 %v180
    %vm188 = vmor %vm186, %vm187
    %v189 = vsel %vm188, %v180, %v185
    %v190 = vrsqrt.pop %v167
    %v191 = vmul.f32 %v190, %v167
    %v192 = vmul.f32 %v191, %v190
    %v193 = vmul.f32 0.5, %v192
    %v194 = vsub.f32 1.5, %v193
    %v195 = vmul.f32 %v190, %v194
    %vm196 = vweird.f32 %v167
    %vm197 = vweird.f32 %v190
    %vm198 = vmor %vm196, %vm197
    %v199 = vsel %vm198, %v190, %v195
    %v200 = vrsqrt.pop %v168
    %v201 = vmul.f32 %v200, %v168
    %v202 = vmul.f32 %v201, %v200
    %v203 = vmul.f32 0.5, %v202
    %v204 = vsub.f32 1.5, %v203
    %v205 = vmul.f32 %v200, %v204
    %vm206 = vweird.f32 %v168
    %vm207 = vweird.f32 %v200
    %vm208 = vmor %vm206, %vm207
    %v209 = vsel %vm208, %v200, %v205
    %v210 = vrsqrt.pop %v169
    %v211 = vmul.f32 %v210, %v169
    %v212 = vmul.f32 %v211, %v210
    %v213 = vmul.f32 0.5, %v212
    %v214 = vsub.f32 1.5, %v213
    %v215 = vmul.f32 %v210, %v214
    %vm216 = vweird.f32 %v169
    %vm217 = vweird.f32 %v210
    %vm218 = vmor %vm216, %vm217
    %v219 = vsel %vm218, %v210, %v215
    %v220 = vmul.f32 %v135, %v179
    %v221 = vmul.f32 %v136, %v189
    %v222 = vmul.f32 %v137, %v199
    %v223 = vmul.f32 %v138, %v209
    %v224 = vmul.f32 %v139, %v219
    %v225 = vperm.slane %v104, 0
    %v226 = vmul.f32 %v220, %v225
    %v227 = vmul.f32 %v221, %v225
    %v228 = vmul.f32 %v222, %v225
    %v229 = vmul.f32 %v223, %v225
    %v230 = vmul.f32 %v224, %v225
    %v231 = vperm.slane %v105, 0
    %v232 = vadd.f32 %v226, %v231
    %v233 = vadd.f32 %v227, %v231
    %v234 = vadd.f32 %v228, %v231
    %v235 = vadd.f32 %v229, %v231
    %v236 = vadd.f32 %v230, %v231
    %v237 = vld [vmem:[%s3] sm:$0xff]
    %v238 = vld [vmem:[%s1 + $0x2a] sm:$0x1]
    %v239 = vperm.slane %v238, 0
    %v241 = vsel %vm106, %v232, 0
    %v244 = vsel %vm106, %v233, 0
    %v247 = vsel %vm106, %v234, 0
    %v250 = vsel %vm106, %v235, 0
    %v253 = vsel %vm106, %v236, 0
    %255 = vmatpush.msra.mxu0 0.0
    %256 = vmatpush.msra.mxu0 0.0
    %257 = vmatpush.msra.mxu0 0.0
    %258 = vmatpush.msra.mxu0 0.0
    %259 = vmatpush.msra.mxu0 0.0
    %260 = vmatpush.msra.mxu0 0.0
    %261 = vmatpush.msra.mxu0 0.0
    %262 = vmatpush.msra.mxu0 0.0
    %263 = vmatpush.msra.mxu0 0.0
    %264 = vmatpush.msra.mxu0 0.0
    %265 = vmatpush.msra.mxu0 0.0
    %266 = vmatpush.msra.mxu0 0.0
    %267 = vmatpush.msra.mxu0 0.0
    %268 = vmatpush.msra.mxu0 0.0
    %269 = vmatpush.msra.mxu0 0.0
    %270 = vmatpush.msra.mxu0 %v237
    %271 = vmatmul.f32.gmra.mxu0 %v241
    %v272 = vpop.f32.mrf.mxu0
    %v273 = vadd.f32 %v239, %v272
    %274 = vmatmul.f32.gmra.mxu0 %v244
    %v275 = vpop.f32.mrf.mxu0
    %v276 = vadd.f32 %v239, %v275
    %277 = vmatmul.f32.gmra.mxu0 %v247
    %v278 = vpop.f32.mrf.mxu0
    %v279 = vadd.f32 %v239, %v278
    %280 = vmatmul.f32.gmra.mxu0 %v250
    %v281 = vpop.f32.mrf.mxu0
    %v282 = vadd.f32 %v239, %v281
    %283 = vmatmul.f32.gmra.mxu0 %v253
    %v284 = vpop.f32.mrf.mxu0
    %v285 = vadd.f32 %v239, %v284
    %286 = vdwg.mxu0
    %v287 = vmul.f32 %v273, %v33
    %v288 = vmul.f32 %v276, %v33
    %v289 = vmul.f32 %v279, %v33
    %v290 = vmul.f32 %v282, %v33
    %v291 = vmul.f32 %v285, %v33
    %297 = vrot.lane.b32.xlu0 %v273, 120
    %v298 = vpop.permute.xlu0 %297
    %299 = vrot.lane.b32.xlu0 %v276, 120
    %v300 = vpop.permute.xlu0 %299
    %301 = vrot.lane.b32.xlu0 %v279, 120
    %v302 = vpop.permute.xlu0 %301
    %303 = vrot.lane.b32.xlu0 %v282, 120
    %v304 = vpop.permute.xlu0 %303
    %305 = vrot.lane.b32.xlu0 %v285, 120
    %v306 = vpop.permute.xlu0 %305
    %v308 = vsel %vm106, %v287, 0
    %v311 = vsel %vm106, %v288, 0
    %v314 = vsel %vm106, %v289, 0
    %v317 = vsel %vm106, %v290, 0
    %v320 = vsel %vm106, %v291, 0
    %v322 = vsel %vm106, %v298, 0
    %v324 = vsel %vm106, %v300, 0
    %v326 = vsel %vm106, %v302, 0
    %v328 = vsel %vm106, %v304, 0
    %v330 = vsel %vm106, %v306, 0
    %332 = vmatpush.xpose.msra.mxu0 0.0
    %333 = vmatpush.xpose.msra.mxu0 0.0
    %334 = vmatpush.xpose.msra.mxu0 0.0
    %335 = vmatpush.xpose.msra.mxu0 0.0
    %336 = vmatpush.xpose.msra.mxu0 0.0
    %337 = vmatpush.xpose.msra.mxu0 0.0
    %338 = vmatpush.xpose.msra.mxu0 0.0
    %339 = vmatpush.xpose.msra.mxu0 0.0
    %340 = vmatpush.xpose.msra.mxu0 0.0
    %341 = vmatpush.xpose.msra.mxu0 0.0
    %342 = vmatpush.xpose.msra.mxu0 0.0
    %343 = vmatpush.xpose.msra.mxu0 %v330
    %344 = vmatpush.xpose.msra.mxu0 %v328
    %345 = vmatpush.xpose.msra.mxu0 %v326
    %346 = vmatpush.xpose.msra.mxu0 %v324
    %347 = vmatpush.xpose.msra.mxu0 %v322
    %348 = vmatmul.f32.gmra.mxu0 %v308
    %v349 = vpop.f32.mrf.mxu0
    %v350 = vadd.f32 %v39, %v349
    %351 = vmatmul.f32.gmra.mxu0 %v311
    %v352 = vpop.f32.mrf.mxu0
    %v353 = vadd.f32 %v40, %v352
    %354 = vmatmul.f32.gmra.mxu0 %v314
    %v355 = vpop.f32.mrf.mxu0
    %v356 = vadd.f32 %v41, %v355
    %357 = vmatmul.f32.gmra.mxu0 %v317
    %v358 = vpop.f32.mrf.mxu0
    %v359 = vadd.f32 %v42, %v358
    %360 = vmatmul.f32.gmra.mxu0 %v320
    %v361 = vpop.f32.mrf.mxu0
    %v362 = vadd.f32 %v43, %v361
    %363 = vdwg.mxu0
    %vm364 = vcmask 277504
    %v365 = vsel %vm364, %v350, -inf
    %366 = vmax.xlane.f32.xlu0 %v365
    %v367 = vpop.xlane.xlu0 %366
    %v368 = vsel %vm364, %v353, -inf
    %369 = vmax.xlane.f32.xlu0 %v368
    %v370 = vpop.xlane.xlu0 %369
    %v371 = vsel %vm364, %v356, -inf
    %372 = vmax.xlane.f32.xlu0 %v371
    %v373 = vpop.xlane.xlu0 %372
    %v374 = vsel %vm364, %v359, -inf
    %375 = vmax.xlane.f32.xlu0 %v374
    %v376 = vpop.xlane.xlu0 %375
    %vm377 = vcmask 271360
    %v378 = vsel %vm377, %v362, -inf
    %379 = vmax.xlane.f32.xlu0 %v378
    %v380 = vpop.xlane.xlu0 %379
    %v381 = vsub.f32 %v350, %v367
    %v382 = vsub.f32 %v353, %v370
    %v383 = vsub.f32 %v356, %v373
    %v384 = vsub.f32 %v359, %v376
    %v385 = vsub.f32 %v362, %v380
    %v386 = vmul.f32 %v381, 1.442695
    %v387 = vpow.pop %v386
    %v388 = vmul.f32 %v382, 1.442695
    %v389 = vpow.pop %v388
    %v390 = vmul.f32 %v383, 1.442695
    %v391 = vpow.pop %v390
    %v392 = vmul.f32 %v384, 1.442695
    %v393 = vpow.pop %v392
    %v394 = vmul.f32 %v385, 1.442695
    %v395 = vpow.pop %v394
    %v396 = vsel %vm364, %v387, 0.0
    %397 = vadd.xlane.f32.xlu0 %v396
    %v398 = vpop.xlane.xlu0 %397
    %v399 = vsel %vm364, %v389, 0.0
    %400 = vadd.xlane.f32.xlu0 %v399
    %v401 = vpop.xlane.xlu0 %400
    %v402 = vsel %vm364, %v391, 0.0
    %403 = vadd.xlane.f32.xlu0 %v402
    %v404 = vpop.xlane.xlu0 %403
    %v405 = vsel %vm364, %v393, 0.0
    %406 = vadd.xlane.f32.xlu0 %v405
    %v407 = vpop.xlane.xlu0 %406
    %v408 = vsel %vm377, %v395, 0.0
    %409 = vadd.xlane.f32.xlu0 %v408
    %v410 = vpop.xlane.xlu0 %409
    %v411 = vrcp.pop %v398
    %v412 = vrcp.pop %v401
    %v413 = vrcp.pop %v404
    %v414 = vrcp.pop %v407
    %v415 = vrcp.pop %v410
    %v416 = vmul.f32 %v387, %v411
    %v417 = vmul.f32 %v389, %v412
    %v418 = vmul.f32 %v391, %v413
    %v419 = vmul.f32 %v393, %v414
    %v420 = vmul.f32 %v395, %v415
    %422 = vrot.lane.b32.xlu0 %v33, 16
    %v423 = vpop.permute.xlu0 %422
    %v425 = vmul.f32 %v273, %v423
    %v426 = vmul.f32 %v276, %v423
    %v427 = vmul.f32 %v279, %v423
    %v428 = vmul.f32 %v282, %v423
    %v429 = vmul.f32 %v285, %v423
    %v430 = vmul.f32 %v273, %v38
    %v431 = vmul.f32 %v276, %v38
    %v432 = vmul.f32 %v279, %v38
    %v433 = vmul.f32 %v282, %v38
    %v434 = vmul.f32 %v285, %v38
    %v436 = vsel %vm106, %v430, 0
    %v439 = vsel %vm106, %v431, 0
    %v442 = vsel %vm106, %v432, 0
    %v445 = vsel %vm106, %v433, 0
    %v448 = vsel %vm106, %v434, 0
    %450 = vmatpush.xpose.msra.mxu0 0.0
    %451 = vmatpush.xpose.msra.mxu0 0.0
    %452 = vmatpush.xpose.msra.mxu0 0.0
    %453 = vmatpush.xpose.msra.mxu0 0.0
    %454 = vmatpush.xpose.msra.mxu0 0.0
    %455 = vmatpush.xpose.msra.mxu0 0.0
    %456 = vmatpush.xpose.msra.mxu0 0.0
    %457 = vmatpush.xpose.msra.mxu0 0.0
    %458 = vmatpush.xpose.msra.mxu0 0.0
    %459 = vmatpush.xpose.msra.mxu0 0.0
    %460 = vmatpush.xpose.msra.mxu0 0.0
    %461 = vmatpush.xpose.msra.mxu0 %v330
    %462 = vmatpush.xpose.msra.mxu0 %v328
    %463 = vmatpush.xpose.msra.mxu0 %v326
    %464 = vmatpush.xpose.msra.mxu0 %v324
    %465 = vmatpush.xpose.msra.mxu0 %v322
    %466 = vmatmul.f32.gmra.mxu0 %v436
    %v467 = vpop.f32.mrf.mxu0
    %v468 = vadd.f32 %v39, %v467
    %469 = vmatmul.f32.gmra.mxu0 %v439
    %v470 = vpop.f32.mrf.mxu0
    %v471 = vadd.f32 %v40, %v470
    %472 = vmatmul.f32.gmra.mxu0 %v442
    %v473 = vpop.f32.mrf.mxu0
    %v474 = vadd.f32 %v41, %v473
    %475 = vmatmul.f32.gmra.mxu0 %v445
    %v476 = vpop.f32.mrf.mxu0
    %v477 = vadd.f32 %v42, %v476
    %478 = vmatmul.f32.gmra.mxu0 %v448
    %v479 = vpop.f32.mrf.mxu0
    %v480 = vadd.f32 %v43, %v479
    %481 = vdwg.mxu0
    %v482 = vsel %vm364, %v468, -inf
    %483 = vmax.xlane.f32.xlu0 %v482
    %v484 = vpop.xlane.xlu0 %483
    %v485 = vsel %vm364, %v471, -inf
    %486 = vmax.xlane.f32.xlu0 %v485
    %v487 = vpop.xlane.xlu0 %486
    %v488 = vsel %vm364, %v474, -inf
    %489 = vmax.xlane.f32.xlu0 %v488
    %v490 = vpop.xlane.xlu0 %489
    %v491 = vsel %vm364, %v477, -inf
    %492 = vmax.xlane.f32.xlu0 %v491
    %v493 = vpop.xlane.xlu0 %492
    %v494 = vsel %vm377, %v480, -inf
    %495 = vmax.xlane.f32.xlu0 %v494
    %v496 = vpop.xlane.xlu0 %495
    %v497 = vsub.f32 %v468, %v484
    %v498 = vsub.f32 %v471, %v487
    %v499 = vsub.f32 %v474, %v490
    %v500 = vsub.f32 %v477, %v493
    %v501 = vsub.f32 %v480, %v496
    %v502 = vmul.f32 %v497, 1.442695
    %v503 = vpow.pop %v502
    %v504 = vmul.f32 %v498, 1.442695
    %v505 = vpow.pop %v504
    %v506 = vmul.f32 %v499, 1.442695
    %v507 = vpow.pop %v506
    %v508 = vmul.f32 %v500, 1.442695
    %v509 = vpow.pop %v508
    %v510 = vmul.f32 %v501, 1.442695
    %v511 = vpow.pop %v510
    %v512 = vsel %vm364, %v503, 0.0
    %513 = vadd.xlane.f32.xlu0 %v512
    %v514 = vpop.xlane.xlu0 %513
    %v515 = vsel %vm364, %v505, 0.0
    %516 = vadd.xlane.f32.xlu0 %v515
    %v517 = vpop.xlane.xlu0 %516
    %v518 = vsel %vm364, %v507, 0.0
    %519 = vadd.xlane.f32.xlu0 %v518
    %v520 = vpop.xlane.xlu0 %519
    %v521 = vsel %vm364, %v509, 0.0
    %522 = vadd.xlane.f32.xlu0 %v521
    %v523 = vpop.xlane.xlu0 %522
    %v524 = vsel %vm377, %v511, 0.0
    %525 = vadd.xlane.f32.xlu0 %v524
    %v526 = vpop.xlane.xlu0 %525
    %v527 = vrcp.pop %v514
    %v528 = vrcp.pop %v517
    %v529 = vrcp.pop %v520
    %v530 = vrcp.pop %v523
    %v531 = vrcp.pop %v526
    %v532 = vmul.f32 %v503, %v527
    %v533 = vmul.f32 %v505, %v528
    %v534 = vmul.f32 %v507, %v529
    %v535 = vmul.f32 %v509, %v530
    %v536 = vmul.f32 %v511, %v531
    %538 = vrot.lane.b32.xlu0 %v38, 16
    %v539 = vpop.permute.xlu0 %538
    %v541 = vmul.f32 %v273, %v539
    %v542 = vmul.f32 %v276, %v539
    %v543 = vmul.f32 %v279, %v539
    %v544 = vmul.f32 %v282, %v539
    %v545 = vmul.f32 %v285, %v539
    %551 = vrot.lane.b32.xlu0 %v541, 112
    %v552 = vpop.permute.xlu0 %551
    %553 = vrot.lane.b32.xlu0 %v542, 112
    %v554 = vpop.permute.xlu0 %553
    %555 = vrot.lane.b32.xlu0 %v543, 112
    %v556 = vpop.permute.xlu0 %555
    %557 = vrot.lane.b32.xlu0 %v544, 112
    %v558 = vpop.permute.xlu0 %557
    %559 = vrot.lane.b32.xlu0 %v545, 112
    %v560 = vpop.permute.xlu0 %559
    %v566 = vsel %vm364, %v532, 0
    %v569 = vsel %vm364, %v533, 0
    %v572 = vsel %vm364, %v534, 0
    %v575 = vsel %vm364, %v535, 0
    %v578 = vsel %vm364, %v536, 0
    %vm580 = vcmask 1041408
    %v581 = vsel %vm580, %v560, 0
    %583 = vmatpush.msra.mxu0 0.0
    %584 = vmatpush.msra.mxu0 0.0
    %585 = vmatpush.msra.mxu0 0.0
    %586 = vmatpush.msra.mxu0 0.0
    %587 = vmatpush.msra.mxu0 0.0
    %588 = vmatpush.msra.mxu0 0.0
    %589 = vmatpush.msra.mxu0 0.0
    %590 = vmatpush.msra.mxu0 0.0
    %591 = vmatpush.msra.mxu0 0.0
    %592 = vmatpush.msra.mxu0 0.0
    %593 = vmatpush.msra.mxu0 0.0
    %594 = vmatpush.msra.mxu0 %v581
    %595 = vmatpush.msra.mxu0 %v558
    %596 = vmatpush.msra.mxu0 %v556
    %597 = vmatpush.msra.mxu0 %v554
    %598 = vmatpush.msra.mxu0 %v552
    %599 = vmatmul.f32.gmra.mxu0 %v566
    %v600 = vpop.f32.mrf.mxu0
    %v601 = vadd.f32 0.0, %v600
    %602 = vmatmul.f32.gmra.mxu0 %v569
    %v603 = vpop.f32.mrf.mxu0
    %v604 = vadd.f32 0.0, %v603
    %605 = vmatmul.f32.gmra.mxu0 %v572
    %v606 = vpop.f32.mrf.mxu0
    %v607 = vadd.f32 0.0, %v606
    %608 = vmatmul.f32.gmra.mxu0 %v575
    %v609 = vpop.f32.mrf.mxu0
    %v610 = vadd.f32 0.0, %v609
    %611 = vmatmul.f32.gmra.mxu0 %v578
    %v612 = vpop.f32.mrf.mxu0
    %v613 = vadd.f32 0.0, %v612
    %614 = vdwg.mxu0
    %620 = vrot.lane.b32.xlu0 %v425, 112
    %v621 = vpop.permute.xlu0 %620
    %622 = vrot.lane.b32.xlu0 %v426, 112
    %v623 = vpop.permute.xlu0 %622
    %624 = vrot.lane.b32.xlu0 %v427, 112
    %v625 = vpop.permute.xlu0 %624
    %626 = vrot.lane.b32.xlu0 %v428, 112
    %v627 = vpop.permute.xlu0 %626
    %628 = vrot.lane.b32.xlu0 %v429, 112
    %v629 = vpop.permute.xlu0 %628
    %v635 = vsel %vm364, %v416, 0
    %v638 = vsel %vm364, %v417, 0
    %v641 = vsel %vm364, %v418, 0
    %v644 = vsel %vm364, %v419, 0
    %v647 = vsel %vm364, %v420, 0
    %v649 = vsel %vm580, %v629, 0
    %651 = vmatpush.msra.mxu0 0.0
    %652 = vmatpush.msra.mxu0 0.0
    %653 = vmatpush.msra.mxu0 0.0
    %654 = vmatpush.msra.mxu0 0.0
    %655 = vmatpush.msra.mxu0 0.0
    %656 = vmatpush.msra.mxu0 0.0
    %657 = vmatpush.msra.mxu0 0.0
    %658 = vmatpush.msra.mxu0 0.0
    %659 = vmatpush.msra.mxu0 0.0
    %660 = vmatpush.msra.mxu0 0.0
    %661 = vmatpush.msra.mxu0 0.0
    %662 = vmatpush.msra.mxu0 %v649
    %663 = vmatpush.msra.mxu0 %v627
    %664 = vmatpush.msra.mxu0 %v625
    %665 = vmatpush.msra.mxu0 %v623
    %666 = vmatpush.msra.mxu0 %v621
    %667 = vmatmul.f32.gmra.mxu0 %v635
    %v668 = vpop.f32.mrf.mxu0
    %v669 = vadd.f32 %v601, %v668
    %670 = vmatmul.f32.gmra.mxu0 %v638
    %v671 = vpop.f32.mrf.mxu0
    %v672 = vadd.f32 %v604, %v671
    %673 = vmatmul.f32.gmra.mxu0 %v641
    %v674 = vpop.f32.mrf.mxu0
    %v675 = vadd.f32 %v607, %v674
    %676 = vmatmul.f32.gmra.mxu0 %v644
    %v677 = vpop.f32.mrf.mxu0
    %v678 = vadd.f32 %v610, %v677
    %679 = vmatmul.f32.gmra.mxu0 %v647
    %v680 = vpop.f32.mrf.mxu0
    %v681 = vadd.f32 %v613, %v680
    %682 = vdwg.mxu0
    %v683 = vadd.f32 %v90, %v669
    %v684 = vadd.f32 %v93, %v672
    %v685 = vadd.f32 %v96, %v675
    %v686 = vadd.f32 %v99, %v678
    %v687 = vadd.f32 %v102, %v681
    %v688 = vld [vmem:[%s1 + $0x24] sm:$0x1]
    %v689 = vld [vmem:[%s1 + $0x25] sm:$0x1]
    %v690 = vsel %vm106, %v683, 0.0
    %691 = vadd.xlane.f32.xlu0 %v690
    %v692 = vpop.xlane.xlu0 %691
    %v693 = vsel %vm106, %v684, 0.0
    %694 = vadd.xlane.f32.xlu0 %v693
    %v695 = vpop.xlane.xlu0 %694
    %v696 = vsel %vm106, %v685, 0.0
    %697 = vadd.xlane.f32.xlu0 %v696
    %v698 = vpop.xlane.xlu0 %697
    %v699 = vsel %vm106, %v686, 0.0
    %700 = vadd.xlane.f32.xlu0 %v699
    %v701 = vpop.xlane.xlu0 %700
    %v702 = vsel %vm119, %v687, 0.0
    %703 = vadd.xlane.f32.xlu0 %v702
    %v704 = vpop.xlane.xlu0 %703
    %v705 = vmul.f32 %v692, %v129
    %v706 = vmul.f32 %v695, %v129
    %v707 = vmul.f32 %v698, %v129
    %v708 = vmul.f32 %v701, %v129
    %v709 = vmul.f32 %v704, %v129
    %v710 = vsub.f32 %v683, %v705
    %v711 = vsub.f32 %v684, %v706
    %v712 = vsub.f32 %v685, %v707
    %v713 = vsub.f32 %v686, %v708
    %v714 = vsub.f32 %v687, %v709
    %v715 = vmul.f32 %v710, %v710
    %v716 = vmul.f32 %v711, %v711
    %v717 = vmul.f32 %v712, %v712
    %v718 = vmul.f32 %v713, %v713
    %v719 = vmul.f32 %v714, %v714
    %v720 = vsel %vm106, %v715, 0.0
    %721 = vadd.xlane.f32.xlu0 %v720
    %v722 = vpop.xlane.xlu0 %721
    %v723 = vsel %vm106, %v716, 0.0
    %724 = vadd.xlane.f32.xlu0 %v723
    %v725 = vpop.xlane.xlu0 %724
    %v726 = vsel %vm106, %v717, 0.0
    %727 = vadd.xlane.f32.xlu0 %v726
    %v728 = vpop.xlane.xlu0 %727
    %v729 = vsel %vm106, %v718, 0.0
    %730 = vadd.xlane.f32.xlu0 %v729
    %v731 = vpop.xlane.xlu0 %730
    %v732 = vsel %vm119, %v719, 0.0
    %733 = vadd.xlane.f32.xlu0 %v732
    %v734 = vpop.xlane.xlu0 %733
    %v735 = vmul.f32 %v722, %v129
    %v736 = vmul.f32 %v725, %v129
    %v737 = vmul.f32 %v728, %v129
    %v738 = vmul.f32 %v731, %v129
    %v739 = vmul.f32 %v734, %v129
    %v740 = vadd.f32 %v735, 1e-05
    %v741 = vadd.f32 %v736, 1e-05
    %v742 = vadd.f32 %v737, 1e-05
    %v743 = vadd.f32 %v738, 1e-05
    %v744 = vadd.f32 %v739, 1e-05
    %v745 = vrsqrt.pop %v740
    %v746 = vmul.f32 %v745, %v740
    %v747 = vmul.f32 %v746, %v745
    %v748 = vmul.f32 0.5, %v747
    %v749 = vsub.f32 1.5, %v748
    %v750 = vmul.f32 %v745, %v749
    %vm751 = vweird.f32 %v740
    %vm752 = vweird.f32 %v745
    %vm753 = vmor %vm751, %vm752
    %v754 = vsel %vm753, %v745, %v750
    %v755 = vrsqrt.pop %v741
    %v756 = vmul.f32 %v755, %v741
    %v757 = vmul.f32 %v756, %v755
    %v758 = vmul.f32 0.5, %v757
    %v759 = vsub.f32 1.5, %v758
    %v760 = vmul.f32 %v755, %v759
    %vm761 = vweird.f32 %v741
    %vm762 = vweird.f32 %v755
    %vm763 = vmor %vm761, %vm762
    %v764 = vsel %vm763, %v755, %v760
    %v765 = vrsqrt.pop %v742
    %v766 = vmul.f32 %v765, %v742
    %v767 = vmul.f32 %v766, %v765
    %v768 = vmul.f32 0.5, %v767
    %v769 = vsub.f32 1.5, %v768
    %v770 = vmul.f32 %v765, %v769
    %vm771 = vweird.f32 %v742
    %vm772 = vweird.f32 %v765
    %vm773 = vmor %vm771, %vm772
    %v774 = vsel %vm773, %v765, %v770
    %v775 = vrsqrt.pop %v743
    %v776 = vmul.f32 %v775, %v743
    %v777 = vmul.f32 %v776, %v775
    %v778 = vmul.f32 0.5, %v777
    %v779 = vsub.f32 1.5, %v778
    %v780 = vmul.f32 %v775, %v779
    %vm781 = vweird.f32 %v743
    %vm782 = vweird.f32 %v775
    %vm783 = vmor %vm781, %vm782
    %v784 = vsel %vm783, %v775, %v780
    %v785 = vrsqrt.pop %v744
    %v786 = vmul.f32 %v785, %v744
    %v787 = vmul.f32 %v786, %v785
    %v788 = vmul.f32 0.5, %v787
    %v789 = vsub.f32 1.5, %v788
    %v790 = vmul.f32 %v785, %v789
    %vm791 = vweird.f32 %v744
    %vm792 = vweird.f32 %v785
    %vm793 = vmor %vm791, %vm792
    %v794 = vsel %vm793, %v785, %v790
    %v795 = vmul.f32 %v710, %v754
    %v796 = vmul.f32 %v711, %v764
    %v797 = vmul.f32 %v712, %v774
    %v798 = vmul.f32 %v713, %v784
    %v799 = vmul.f32 %v714, %v794
    %v800 = vperm.slane %v688, 0
    %v801 = vmul.f32 %v795, %v800
    %v802 = vmul.f32 %v796, %v800
    %v803 = vmul.f32 %v797, %v800
    %v804 = vmul.f32 %v798, %v800
    %v805 = vmul.f32 %v799, %v800
    %v806 = vperm.slane %v689, 0
    %v807 = vadd.f32 %v801, %v806
    %v808 = vadd.f32 %v802, %v806
    %v809 = vadd.f32 %v803, %v806
    %v810 = vadd.f32 %v804, %v806
    %v811 = vadd.f32 %v805, %v806
    %v812 = vld [vmem:[%s4] sm:$0xff]
    %v813 = vld [vmem:[%s1 + $0x2c] sm:$0x1]
    %v814 = vperm.slane %v813, 0
    %v816 = vsel %vm106, %v807, 0
    %v819 = vsel %vm106, %v808, 0
    %v822 = vsel %vm106, %v809, 0
    %v825 = vsel %vm106, %v810, 0
    %v828 = vsel %vm106, %v811, 0
    %830 = vmatpush.msra.mxu0 0.0
    %831 = vmatpush.msra.mxu0 0.0
    %832 = vmatpush.msra.mxu0 0.0
    %833 = vmatpush.msra.mxu0 0.0
    %834 = vmatpush.msra.mxu0 0.0
    %835 = vmatpush.msra.mxu0 0.0
    %836 = vmatpush.msra.mxu0 0.0
    %837 = vmatpush.msra.mxu0 0.0
    %838 = vmatpush.msra.mxu0 0.0
    %839 = vmatpush.msra.mxu0 0.0
    %840 = vmatpush.msra.mxu0 0.0
    %841 = vmatpush.msra.mxu0 0.0
    %842 = vmatpush.msra.mxu0 0.0
    %843 = vmatpush.msra.mxu0 0.0
    %844 = vmatpush.msra.mxu0 0.0
    %845 = vmatpush.msra.mxu0 %v812
    %846 = vmatmul.f32.gmra.mxu0 %v816
    %v847 = vpop.f32.mrf.mxu0
    %v848 = vadd.f32 %v814, %v847
    %849 = vmatmul.f32.gmra.mxu0 %v819
    %v850 = vpop.f32.mrf.mxu0
    %v851 = vadd.f32 %v814, %v850
    %852 = vmatmul.f32.gmra.mxu0 %v822
    %v853 = vpop.f32.mrf.mxu0
    %v854 = vadd.f32 %v814, %v853
    %855 = vmatmul.f32.gmra.mxu0 %v825
    %v856 = vpop.f32.mrf.mxu0
    %v857 = vadd.f32 %v814, %v856
    %858 = vmatmul.f32.gmra.mxu0 %v828
    %v859 = vpop.f32.mrf.mxu0
    %v860 = vadd.f32 %v814, %v859
    %861 = vdwg.mxu0
    %v862 = vmul.f32 %v848, %v848
    %v863 = vmul.f32 %v851, %v851
    %v864 = vmul.f32 %v854, %v854
    %v865 = vmul.f32 %v857, %v857
    %v866 = vmul.f32 %v860, %v860
    %v867 = vmul.f32 %v848, %v862
    %v868 = vmul.f32 %v851, %v863
    %v869 = vmul.f32 %v854, %v864
    %v870 = vmul.f32 %v857, %v865
    %v871 = vmul.f32 %v860, %v866
    %v872 = vmul.f32 %v867, 0.044715
    %v873 = vmul.f32 %v868, 0.044715
    %v874 = vmul.f32 %v869, 0.044715
    %v875 = vmul.f32 %v870, 0.044715
    %v876 = vmul.f32 %v871, 0.044715
    %v877 = vadd.f32 %v848, %v872
    %v878 = vadd.f32 %v851, %v873
    %v879 = vadd.f32 %v854, %v874
    %v880 = vadd.f32 %v857, %v875
    %v881 = vadd.f32 %v860, %v876
    %v882 = vmul.f32 %v877, 0.7978846
    %v883 = vmul.f32 %v878, 0.7978846
    %v884 = vmul.f32 %v879, 0.7978846
    %v885 = vmul.f32 %v880, 0.7978846
    %v886 = vmul.f32 %v881, 0.7978846
    %v887 = vtanh.pop %v882
    %v888 = vtanh.pop %v883
    %v889 = vtanh.pop %v884
    %v890 = vtanh.pop %v885
    %v891 = vtanh.pop %v886
    %v892 = vadd.f32 %v887, 1.0
    %v893 = vadd.f32 %v888, 1.0
    %v894 = vadd.f32 %v889, 1.0
    %v895 = vadd.f32 %v890, 1.0
    %v896 = vadd.f32 %v891, 1.0
    %v897 = vmul.f32 %v892, 0.5
    %v898 = vmul.f32 %v893, 0.5
    %v899 = vmul.f32 %v894, 0.5
    %v900 = vmul.f32 %v895, 0.5
    %v901 = vmul.f32 %v896, 0.5
    %v902 = vmul.f32 %v848, %v897
    %v903 = vmul.f32 %v851, %v898
    %v904 = vmul.f32 %v854, %v899
    %v905 = vmul.f32 %v857, %v900
    %v906 = vmul.f32 %v860, %v901
    %v907 = vld [vmem:[%s5] sm:$0xff]
    %v908 = vld [vmem:[%s5 + $0x8] sm:$0xff]
    %v909 = vld [vmem:[%s5 + $0x10] sm:$0xff]
    %v910 = vld [vmem:[%s5 + $0x18] sm:$0xff]
    %vm911 = vcmask 261120
    %v913 = vsel %vm911, %v902, 0
    %v916 = vsel %vm911, %v903, 0
    %v919 = vsel %vm911, %v904, 0
    %v922 = vsel %vm911, %v905, 0
    %v925 = vsel %vm911, %v906, 0
    %927 = vmatpush.msra.mxu0 0.0
    %928 = vmatpush.msra.mxu0 0.0
    %929 = vmatpush.msra.mxu0 0.0
    %930 = vmatpush.msra.mxu0 0.0
    %931 = vmatpush.msra.mxu0 0.0
    %932 = vmatpush.msra.mxu0 0.0
    %933 = vmatpush.msra.mxu0 0.0
    %934 = vmatpush.msra.mxu0 0.0
    %935 = vmatpush.msra.mxu0 0.0
    %936 = vmatpush.msra.mxu0 0.0
    %937 = vmatpush.msra.mxu0 0.0
    %938 = vmatpush.msra.mxu0 0.0
    %939 = vmatpush.msra.mxu0 %v910
    %940 = vmatpush.msra.mxu0 %v909
    %941 = vmatpush.msra.mxu0 %v908
    %942 = vmatpush.msra.mxu0 %v907
    %943 = vmatmul.f32.gmra.mxu0 %v913
    %v944 = vpop.f32.mrf.mxu0
    %v945 = vadd.f32 0.0, %v944
    %946 = vmatmul.f32.gmra.mxu0 %v916
    %v947 = vpop.f32.mrf.mxu0
    %v948 = vadd.f32 0.0, %v947
    %949 = vmatmul.f32.gmra.mxu0 %v919
    %v950 = vpop.f32.mrf.mxu0
    %v951 = vadd.f32 0.0, %v950
    %952 = vmatmul.f32.gmra.mxu0 %v922
    %v953 = vpop.f32.mrf.mxu0
    %v954 = vadd.f32 0.0, %v953
    %955 = vmatmul.f32.gmra.mxu0 %v925
    %v956 = vpop.f32.mrf.mxu0
    %v957 = vadd.f32 0.0, %v956
    %958 = vdwg.mxu0
    %v959 = vadd.f32 %v683, %v945
    %v960 = vadd.f32 %v684, %v948
    %v961 = vadd.f32 %v685, %v951
    %v962 = vadd.f32 %v686, %v954
    %v963 = vadd.f32 %v687, %v957
    %v964 = vld [vmem:[%s1 + $0x2e] sm:$0x1]
    %v965 = vperm.slane %v964, 0
    %v966 = vadd.f32 %v959, %v965
    %v967 = vadd.f32 %v960, %v965
    %v968 = vadd.f32 %v961, %v965
    %v969 = vadd.f32 %v962, %v965
    %v970 = vadd.f32 %v963, %v965
    %v971 = vld [vmem:[%s1 + $0x26] sm:$0x1]
    %v972 = vld [vmem:[%s1 + $0x27] sm:$0x1]
    %v973 = vsel %vm106, %v966, 0.0
    %974 = vadd.xlane.f32.xlu0 %v973
    %v975 = vpop.xlane.xlu0 %974
    %v976 = vsel %vm106, %v967, 0.0
    %977 = vadd.xlane.f32.xlu0 %v976
    %v978 = vpop.xlane.xlu0 %977
    %v979 = vsel %vm106, %v968, 0.0
    %980 = vadd.xlane.f32.xlu0 %v979
    %v981 = vpop.xlane.xlu0 %980
    %v982 = vsel %vm106, %v969, 0.0
    %983 = vadd.xlane.f32.xlu0 %v982
    %v984 = vpop.xlane.xlu0 %983
    %v985 = vsel %vm119, %v970, 0.0
    %986 = vadd.xlane.f32.xlu0 %v985
    %v987 = vpop.xlane.xlu0 %986
    %v988 = vmul.f32 %v975, %v129
    %v989 = vmul.f32 %v978, %v129
    %v990 = vmul.f32 %v981, %v129
    %v991 = vmul.f32 %v984, %v129
    %v992 = vmul.f32 %v987, %v129
    %v993 = vsub.f32 %v966, %v988
    %v994 = vsub.f32 %v967, %v989
    %v995 = vsub.f32 %v968, %v990
    %v996 = vsub.f32 %v969, %v991
    %v997 = vsub.f32 %v970, %v992
    %v998 = vmul.f32 %v993, %v993
    %v999 = vmul.f32 %v994, %v994
    %v1000 = vmul.f32 %v995, %v995
    %v1001 = vmul.f32 %v996, %v996
    %v1002 = vmul.f32 %v997, %v997
    %v1003 = vsel %vm106, %v998, 0.0
    %1004 = vadd.xlane.f32.xlu0 %v1003
    %v1005 = vpop.xlane.xlu0 %1004
    %v1006 = vsel %vm106, %v999, 0.0
    %1007 = vadd.xlane.f32.xlu0 %v1006
    %v1008 = vpop.xlane.xlu0 %1007
    %v1009 = vsel %vm106, %v1000, 0.0
    %1010 = vadd.xlane.f32.xlu0 %v1009
    %v1011 = vpop.xlane.xlu0 %1010
    %v1012 = vsel %vm106, %v1001, 0.0
    %1013 = vadd.xlane.f32.xlu0 %v1012
    %v1014 = vpop.xlane.xlu0 %1013
    %v1015 = vsel %vm119, %v1002, 0.0
    %1016 = vadd.xlane.f32.xlu0 %v1015
    %v1017 = vpop.xlane.xlu0 %1016
    %v1018 = vmul.f32 %v1005, %v129
    %v1019 = vmul.f32 %v1008, %v129
    %v1020 = vmul.f32 %v1011, %v129
    %v1021 = vmul.f32 %v1014, %v129
    %v1022 = vmul.f32 %v1017, %v129
    %v1023 = vadd.f32 %v1018, 1e-05
    %v1024 = vadd.f32 %v1019, 1e-05
    %v1025 = vadd.f32 %v1020, 1e-05
    %v1026 = vadd.f32 %v1021, 1e-05
    %v1027 = vadd.f32 %v1022, 1e-05
    %v1028 = vrsqrt.pop %v1023
    %v1029 = vmul.f32 %v1028, %v1023
    %v1030 = vmul.f32 %v1029, %v1028
    %v1031 = vmul.f32 0.5, %v1030
    %v1032 = vsub.f32 1.5, %v1031
    %v1033 = vmul.f32 %v1028, %v1032
    %vm1034 = vweird.f32 %v1023
    %vm1035 = vweird.f32 %v1028
    %vm1036 = vmor %vm1034, %vm1035
    %v1037 = vsel %vm1036, %v1028, %v1033
    %v1038 = vrsqrt.pop %v1024
    %v1039 = vmul.f32 %v1038, %v1024
    %v1040 = vmul.f32 %v1039, %v1038
    %v1041 = vmul.f32 0.5, %v1040
    %v1042 = vsub.f32 1.5, %v1041
    %v1043 = vmul.f32 %v1038, %v1042
    %vm1044 = vweird.f32 %v1024
    %vm1045 = vweird.f32 %v1038
    %vm1046 = vmor %vm1044, %vm1045
    %v1047 = vsel %vm1046, %v1038, %v1043
    %v1048 = vrsqrt.pop %v1025
    %v1049 = vmul.f32 %v1048, %v1025
    %v1050 = vmul.f32 %v1049, %v1048
    %v1051 = vmul.f32 0.5, %v1050
    %v1052 = vsub.f32 1.5, %v1051
    %v1053 = vmul.f32 %v1048, %v1052
    %vm1054 = vweird.f32 %v1025
    %vm1055 = vweird.f32 %v1048
    %vm1056 = vmor %vm1054, %vm1055
    %v1057 = vsel %vm1056, %v1048, %v1053
    %v1058 = vrsqrt.pop %v1026
    %v1059 = vmul.f32 %v1058, %v1026
    %v1060 = vmul.f32 %v1059, %v1058
    %v1061 = vmul.f32 0.5, %v1060
    %v1062 = vsub.f32 1.5, %v1061
    %v1063 = vmul.f32 %v1058, %v1062
    %vm1064 = vweird.f32 %v1026
    %vm1065 = vweird.f32 %v1058
    %vm1066 = vmor %vm1064, %vm1065
    %v1067 = vsel %vm1066, %v1058, %v1063
    %v1068 = vrsqrt.pop %v1027
    %v1069 = vmul.f32 %v1068, %v1027
    %v1070 = vmul.f32 %v1069, %v1068
    %v1071 = vmul.f32 0.5, %v1070
    %v1072 = vsub.f32 1.5, %v1071
    %v1073 = vmul.f32 %v1068, %v1072
    %vm1074 = vweird.f32 %v1027
    %vm1075 = vweird.f32 %v1068
    %vm1076 = vmor %vm1074, %vm1075
    %v1077 = vsel %vm1076, %v1068, %v1073
    %v1078 = vmul.f32 %v993, %v1037
    %v1079 = vmul.f32 %v994, %v1047
    %v1080 = vmul.f32 %v995, %v1057
    %v1081 = vmul.f32 %v996, %v1067
    %v1082 = vmul.f32 %v997, %v1077
    %v1083 = vperm.slane %v971, 0
    %v1084 = vmul.f32 %v1078, %v1083
    %v1085 = vmul.f32 %v1079, %v1083
    %v1086 = vmul.f32 %v1080, %v1083
    %v1087 = vmul.f32 %v1081, %v1083
    %v1088 = vmul.f32 %v1082, %v1083
    %v1089 = vperm.slane %v972, 0
    %v1090 = vadd.f32 %v1084, %v1089
    %v1091 = vadd.f32 %v1085, %v1089
    %v1092 = vadd.f32 %v1086, %v1089
    %v1093 = vadd.f32 %v1087, %v1089
    %v1094 = vadd.f32 %v1088, %v1089
    %s1095 = scalar_lea.vmem %s3, 8
    %v1096 = vld [vmem:[%s1095] sm:$0xff]
    %v1097 = vld [vmem:[%s1 + $0x2b] sm:$0x1]
    %v1098 = vperm.slane %v1097, 0
    %v1100 = vsel %vm106, %v1090, 0
    %v1103 = vsel %vm106, %v1091, 0
    %v1106 = vsel %vm106, %v1092, 0
    %v1109 = vsel %vm106, %v1093, 0
    %v1112 = vsel %vm106, %v1094, 0
    %1114 = vmatpush.msra.mxu0 0.0
    %1115 = vmatpush.msra.mxu0 0.0
    %1116 = vmatpush.msra.mxu0 0.0
    %1117 = vmatpush.msra.mxu0 0.0
    %1118 = vmatpush.msra.mxu0 0.0
    %1119 = vmatpush.msra.mxu0 0.0
    %1120 = vmatpush.msra.mxu0 0.0
    %1121 = vmatpush.msra.mxu0 0.0
    %1122 = vmatpush.msra.mxu0 0.0
    %1123 = vmatpush.msra.mxu0 0.0
    %1124 = vmatpush.msra.mxu0 0.0
    %1125 = vmatpush.msra.mxu0 0.0
    %1126 = vmatpush.msra.mxu0 0.0
    %1127 = vmatpush.msra.mxu0 0.0
    %1128 = vmatpush.msra.mxu0 0.0
    %1129 = vmatpush.msra.mxu0 %v1096
    %1130 = vmatmul.f32.gmra.mxu0 %v1100
    %v1131 = vpop.f32.mrf.mxu0
    %v1132 = vadd.f32 %v1098, %v1131
    %1133 = vmatmul.f32.gmra.mxu0 %v1103
    %v1134 = vpop.f32.mrf.mxu0
    %v1135 = vadd.f32 %v1098, %v1134
    %1136 = vmatmul.f32.gmra.mxu0 %v1106
    %v1137 = vpop.f32.mrf.mxu0
    %v1138 = vadd.f32 %v1098, %v1137
    %1139 = vmatmul.f32.gmra.mxu0 %v1109
    %v1140 = vpop.f32.mrf.mxu0
    %v1141 = vadd.f32 %v1098, %v1140
    %1142 = vmatmul.f32.gmra.mxu0 %v1112
    %v1143 = vpop.f32.mrf.mxu0
    %v1144 = vadd.f32 %v1098, %v1143
    %1145 = vdwg.mxu0
    %v1146 = vmul.f32 %v1132, %v33
    %v1147 = vmul.f32 %v1135, %v33
    %v1148 = vmul.f32 %v1138, %v33
    %v1149 = vmul.f32 %v1141, %v33
    %v1150 = vmul.f32 %v1144, %v33
    %1156 = vrot.lane.b32.xlu0 %v1132, 120
    %v1157 = vpop.permute.xlu0 %1156
    %1158 = vrot.lane.b32.xlu0 %v1135, 120
    %v1159 = vpop.permute.xlu0 %1158
    %1160 = vrot.lane.b32.xlu0 %v1138, 120
    %v1161 = vpop.permute.xlu0 %1160
    %1162 = vrot.lane.b32.xlu0 %v1141, 120
    %v1163 = vpop.permute.xlu0 %1162
    %1164 = vrot.lane.b32.xlu0 %v1144, 120
    %v1165 = vpop.permute.xlu0 %1164
    %v1167 = vsel %vm106, %v1146, 0
    %v1170 = vsel %vm106, %v1147, 0
    %v1173 = vsel %vm106, %v1148, 0
    %v1176 = vsel %vm106, %v1149, 0
    %v1179 = vsel %vm106, %v1150, 0
    %v1181 = vsel %vm106, %v1157, 0
    %v1183 = vsel %vm106, %v1159, 0
    %v1185 = vsel %vm106, %v1161, 0
    %v1187 = vsel %vm106, %v1163, 0
    %v1189 = vsel %vm106, %v1165, 0
    %1191 = vmatpush.xpose.msra.mxu0 0.0
    %1192 = vmatpush.xpose.msra.mxu0 0.0
    %1193 = vmatpush.xpose.msra.mxu0 0.0
    %1194 = vmatpush.xpose.msra.mxu0 0.0
    %1195 = vmatpush.xpose.msra.mxu0 0.0
    %1196 = vmatpush.xpose.msra.mxu0 0.0
    %1197 = vmatpush.xpose.msra.mxu0 0.0
    %1198 = vmatpush.xpose.msra.mxu0 0.0
    %1199 = vmatpush.xpose.msra.mxu0 0.0
    %1200 = vmatpush.xpose.msra.mxu0 0.0
    %1201 = vmatpush.xpose.msra.mxu0 0.0
    %1202 = vmatpush.xpose.msra.mxu0 %v1189
    %1203 = vmatpush.xpose.msra.mxu0 %v1187
    %1204 = vmatpush.xpose.msra.mxu0 %v1185
    %1205 = vmatpush.xpose.msra.mxu0 %v1183
    %1206 = vmatpush.xpose.msra.mxu0 %v1181
    %1207 = vmatmul.f32.gmra.mxu0 %v1167
    %v1208 = vpop.f32.mrf.mxu0
    %v1209 = vadd.f32 %v39, %v1208
    %1210 = vmatmul.f32.gmra.mxu0 %v1170
    %v1211 = vpop.f32.mrf.mxu0
    %v1212 = vadd.f32 %v40, %v1211
    %1213 = vmatmul.f32.gmra.mxu0 %v1173
    %v1214 = vpop.f32.mrf.mxu0
    %v1215 = vadd.f32 %v41, %v1214
    %1216 = vmatmul.f32.gmra.mxu0 %v1176
    %v1217 = vpop.f32.mrf.mxu0
    %v1218 = vadd.f32 %v42, %v1217
    %1219 = vmatmul.f32.gmra.mxu0 %v1179
    %v1220 = vpop.f32.mrf.mxu0
    %v1221 = vadd.f32 %v43, %v1220
    %1222 = vdwg.mxu0
    %v1223 = vsel %vm364, %v1209, -inf
    %1224 = vmax.xlane.f32.xlu0 %v1223
    %v1225 = vpop.xlane.xlu0 %1224
    %v1226 = vsel %vm364, %v1212, -inf
    %1227 = vmax.xlane.f32.xlu0 %v1226
    %v1228 = vpop.xlane.xlu0 %1227
    %v1229 = vsel %vm364, %v1215, -inf
    %1230 = vmax.xlane.f32.xlu0 %v1229
    %v1231 = vpop.xlane.xlu0 %1230
    %v1232 = vsel %vm364, %v1218, -inf
    %1233 = vmax.xlane.f32.xlu0 %v1232
    %v1234 = vpop.xlane.xlu0 %1233
    %v1235 = vsel %vm377, %v1221, -inf
    %1236 = vmax.xlane.f32.xlu0 %v1235
    %v1237 = vpop.xlane.xlu0 %1236
    %v1238 = vsub.f32 %v1209, %v1225
    %v1239 = vsub.f32 %v1212, %v1228
    %v1240 = vsub.f32 %v1215, %v1231
    %v1241 = vsub.f32 %v1218, %v1234
    %v1242 = vsub.f32 %v1221, %v1237
    %v1243 = vmul.f32 %v1238, 1.442695
    %v1244 = vpow.pop %v1243
    %v1245 = vmul.f32 %v1239, 1.442695
    %v1246 = vpow.pop %v1245
    %v1247 = vmul.f32 %v1240, 1.442695
    %v1248 = vpow.pop %v1247
    %v1249 = vmul.f32 %v1241, 1.442695
    %v1250 = vpow.pop %v1249
    %v1251 = vmul.f32 %v1242, 1.442695
    %v1252 = vpow.pop %v1251
    %v1253 = vsel %vm364, %v1244, 0.0
    %1254 = vadd.xlane.f32.xlu0 %v1253
    %v1255 = vpop.xlane.xlu0 %1254
    %v1256 = vsel %vm364, %v1246, 0.0
    %1257 = vadd.xlane.f32.xlu0 %v1256
    %v1258 = vpop.xlane.xlu0 %1257
    %v1259 = vsel %vm364, %v1248, 0.0
    %1260 = vadd.xlane.f32.xlu0 %v1259
    %v1261 = vpop.xlane.xlu0 %1260
    %v1262 = vsel %vm364, %v1250, 0.0
    %1263 = vadd.xlane.f32.xlu0 %v1262
    %v1264 = vpop.xlane.xlu0 %1263
    %v1265 = vsel %vm377, %v1252, 0.0
    %1266 = vadd.xlane.f32.xlu0 %v1265
    %v1267 = vpop.xlane.xlu0 %1266
    %v1268 = vrcp.pop %v1255
    %v1269 = vrcp.pop %v1258
    %v1270 = vrcp.pop %v1261
    %v1271 = vrcp.pop %v1264
    %v1272 = vrcp.pop %v1267
    %v1273 = vmul.f32 %v1244, %v1268
    %v1274 = vmul.f32 %v1246, %v1269
    %v1275 = vmul.f32 %v1248, %v1270
    %v1276 = vmul.f32 %v1250, %v1271
    %v1277 = vmul.f32 %v1252, %v1272
    %v1278 = vmul.f32 %v1132, %v423
    %v1279 = vmul.f32 %v1135, %v423
    %v1280 = vmul.f32 %v1138, %v423
    %v1281 = vmul.f32 %v1141, %v423
    %v1282 = vmul.f32 %v1144, %v423
    %v1283 = vmul.f32 %v1132, %v38
    %v1284 = vmul.f32 %v1135, %v38
    %v1285 = vmul.f32 %v1138, %v38
    %v1286 = vmul.f32 %v1141, %v38
    %v1287 = vmul.f32 %v1144, %v38
    %v1289 = vsel %vm106, %v1283, 0
    %v1292 = vsel %vm106, %v1284, 0
    %v1295 = vsel %vm106, %v1285, 0
    %v1298 = vsel %vm106, %v1286, 0
    %v1301 = vsel %vm106, %v1287, 0
    %1303 = vmatpush.xpose.msra.mxu0 0.0
    %1304 = vmatpush.xpose.msra.mxu0 0.0
    %1305 = vmatpush.xpose.msra.mxu0 0.0
    %1306 = vmatpush.xpose.msra.mxu0 0.0
    %1307 = vmatpush.xpose.msra.mxu0 0.0
    %1308 = vmatpush.xpose.msra.mxu0 0.0
    %1309 = vmatpush.xpose.msra.mxu0 0.0
    %1310 = vmatpush.xpose.msra.mxu0 0.0
    %1311 = vmatpush.xpose.msra.mxu0 0.0
    %1312 = vmatpush.xpose.msra.mxu0 0.0
    %1313 = vmatpush.xpose.msra.mxu0 0.0
    %1314 = vmatpush.xpose.msra.mxu0 %v1189
    %1315 = vmatpush.xpose.msra.mxu0 %v1187
    %1316 = vmatpush.xpose.msra.mxu0 %v1185
    %1317 = vmatpush.xpose.msra.mxu0 %v1183
    %1318 = vmatpush.xpose.msra.mxu0 %v1181
    %1319 = vmatmul.f32.gmra.mxu0 %v1289
    %v1320 = vpop.f32.mrf.mxu0
    %v1321 = vadd.f32 %v39, %v1320
    %1322 = vmatmul.f32.gmra.mxu0 %v1292
    %v1323 = vpop.f32.mrf.mxu0
    %v1324 = vadd.f32 %v40, %v1323
    %1325 = vmatmul.f32.gmra.mxu0 %v1295
    %v1326 = vpop.f32.mrf.mxu0
    %v1327 = vadd.f32 %v41, %v1326
    %1328 = vmatmul.f32.gmra.mxu0 %v1298
    %v1329 = vpop.f32.mrf.mxu0
    %v1330 = vadd.f32 %v42, %v1329
    %1331 = vmatmul.f32.gmra.mxu0 %v1301
    %v1332 = vpop.f32.mrf.mxu0
    %v1333 = vadd.f32 %v43, %v1332
    %1334 = vdwg.mxu0
    %v1335 = vsel %vm364, %v1321, -inf
    %1336 = vmax.xlane.f32.xlu0 %v1335
    %v1337 = vpop.xlane.xlu0 %1336
    %v1338 = vsel %vm364, %v1324, -inf
    %1339 = vmax.xlane.f32.xlu0 %v1338
    %v1340 = vpop.xlane.xlu0 %1339
    %v1341 = vsel %vm364, %v1327, -inf
    %1342 = vmax.xlane.f32.xlu0 %v1341
    %v1343 = vpop.xlane.xlu0 %1342
    %v1344 = vsel %vm364, %v1330, -inf
    %1345 = vmax.xlane.f32.xlu0 %v1344
    %v1346 = vpop.xlane.xlu0 %1345
    %v1347 = vsel %vm377, %v1333, -inf
    %1348 = vmax.xlane.f32.xlu0 %v1347
    %v1349 = vpop.xlane.xlu0 %1348
    %v1350 = vsub.f32 %v1321, %v1337
    %v1351 = vsub.f32 %v1324, %v1340
    %v1352 = vsub.f32 %v1327, %v1343
    %v1353 = vsub.f32 %v1330, %v1346
    %v1354 = vsub.f32 %v1333, %v1349
    %v1355 = vmul.f32 %v1350, 1.442695
    %v1356 = vpow.pop %v1355
    %v1357 = vmul.f32 %v1351, 1.442695
    %v1358 = vpow.pop %v1357
    %v1359 = vmul.f32 %v1352, 1.442695
    %v1360 = vpow.pop %v1359
    %v1361 = vmul.f32 %v1353, 1.442695
    %v1362 = vpow.pop %v1361
    %v1363 = vmul.f32 %v1354, 1.442695
    %v1364 = vpow.pop %v1363
    %v1365 = vsel %vm364, %v1356, 0.0
    %1366 = vadd.xlane.f32.xlu0 %v1365
    %v1367 = vpop.xlane.xlu0 %1366
    %v1368 = vsel %vm364, %v1358, 0.0
    %1369 = vadd.xlane.f32.xlu0 %v1368
    %v1370 = vpop.xlane.xlu0 %1369
    %v1371 = vsel %vm364, %v1360, 0.0
    %1372 = vadd.xlane.f32.xlu0 %v1371
    %v1373 = vpop.xlane.xlu0 %1372
    %v1374 = vsel %vm364, %v1362, 0.0
    %1375 = vadd.xlane.f32.xlu0 %v1374
    %v1376 = vpop.xlane.xlu0 %1375
    %v1377 = vsel %vm377, %v1364, 0.0
    %1378 = vadd.xlane.f32.xlu0 %v1377
    %v1379 = vpop.xlane.xlu0 %1378
    %v1380 = vrcp.pop %v1367
    %v1381 = vrcp.pop %v1370
    %v1382 = vrcp.pop %v1373
    %v1383 = vrcp.pop %v1376
    %v1384 = vrcp.pop %v1379
    %v1385 = vmul.f32 %v1356, %v1380
    %v1386 = vmul.f32 %v1358, %v1381
    %v1387 = vmul.f32 %v1360, %v1382
    %v1388 = vmul.f32 %v1362, %v1383
    %v1389 = vmul.f32 %v1364, %v1384
    %v1390 = vmul.f32 %v1132, %v539
    %v1391 = vmul.f32 %v1135, %v539
    %v1392 = vmul.f32 %v1138, %v539
    %v1393 = vmul.f32 %v1141, %v539
    %v1394 = vmul.f32 %v1144, %v539
    %1400 = vrot.lane.b32.xlu0 %v1390, 112
    %v1401 = vpop.permute.xlu0 %1400
    %1402 = vrot.lane.b32.xlu0 %v1391, 112
    %v1403 = vpop.permute.xlu0 %1402
    %1404 = vrot.lane.b32.xlu0 %v1392, 112
    %v1405 = vpop.permute.xlu0 %1404
    %1406 = vrot.lane.b32.xlu0 %v1393, 112
    %v1407 = vpop.permute.xlu0 %1406
    %1408 = vrot.lane.b32.xlu0 %v1394, 112
    %v1409 = vpop.permute.xlu0 %1408
    %v1415 = vsel %vm364, %v1385, 0
    %v1418 = vsel %vm364, %v1386, 0
    %v1421 = vsel %vm364, %v1387, 0
    %v1424 = vsel %vm364, %v1388, 0
    %v1427 = vsel %vm364, %v1389, 0
    %v1429 = vsel %vm580, %v1409, 0
    %1431 = vmatpush.msra.mxu0 0.0
    %1432 = vmatpush.msra.mxu0 0.0
    %1433 = vmatpush.msra.mxu0 0.0
    %1434 = vmatpush.msra.mxu0 0.0
    %1435 = vmatpush.msra.mxu0 0.0
    %1436 = vmatpush.msra.mxu0 0.0
    %1437 = vmatpush.msra.mxu0 0.0
    %1438 = vmatpush.msra.mxu0 0.0
    %1439 = vmatpush.msra.mxu0 0.0
    %1440 = vmatpush.msra.mxu0 0.0
    %1441 = vmatpush.msra.mxu0 0.0
    %1442 = vmatpush.msra.mxu0 %v1429
    %1443 = vmatpush.msra.mxu0 %v1407
    %1444 = vmatpush.msra.mxu0 %v1405
    %1445 = vmatpush.msra.mxu0 %v1403
    %1446 = vmatpush.msra.mxu0 %v1401
    %1447 = vmatmul.f32.gmra.mxu0 %v1415
    %v1448 = vpop.f32.mrf.mxu0
    %v1449 = vadd.f32 0.0, %v1448
    %1450 = vmatmul.f32.gmra.mxu0 %v1418
    %v1451 = vpop.f32.mrf.mxu0
    %v1452 = vadd.f32 0.0, %v1451
    %1453 = vmatmul.f32.gmra.mxu0 %v1421
    %v1454 = vpop.f32.mrf.mxu0
    %v1455 = vadd.f32 0.0, %v1454
    %1456 = vmatmul.f32.gmra.mxu0 %v1424
    %v1457 = vpop.f32.mrf.mxu0
    %v1458 = vadd.f32 0.0, %v1457
    %1459 = vmatmul.f32.gmra.mxu0 %v1427
    %v1460 = vpop.f32.mrf.mxu0
    %v1461 = vadd.f32 0.0, %v1460
    %1462 = vdwg.mxu0
    %1468 = vrot.lane.b32.xlu0 %v1278, 112
    %v1469 = vpop.permute.xlu0 %1468
    %1470 = vrot.lane.b32.xlu0 %v1279, 112
    %v1471 = vpop.permute.xlu0 %1470
    %1472 = vrot.lane.b32.xlu0 %v1280, 112
    %v1473 = vpop.permute.xlu0 %1472
    %1474 = vrot.lane.b32.xlu0 %v1281, 112
    %v1475 = vpop.permute.xlu0 %1474
    %1476 = vrot.lane.b32.xlu0 %v1282, 112
    %v1477 = vpop.permute.xlu0 %1476
    %v1483 = vsel %vm364, %v1273, 0
    %v1486 = vsel %vm364, %v1274, 0
    %v1489 = vsel %vm364, %v1275, 0
    %v1492 = vsel %vm364, %v1276, 0
    %v1495 = vsel %vm364, %v1277, 0
    %v1497 = vsel %vm580, %v1477, 0
    %1499 = vmatpush.msra.mxu0 0.0
    %1500 = vmatpush.msra.mxu0 0.0
    %1501 = vmatpush.msra.mxu0 0.0
    %1502 = vmatpush.msra.mxu0 0.0
    %1503 = vmatpush.msra.mxu0 0.0
    %1504 = vmatpush.msra.mxu0 0.0
    %1505 = vmatpush.msra.mxu0 0.0
    %1506 = vmatpush.msra.mxu0 0.0
    %1507 = vmatpush.msra.mxu0 0.0
    %1508 = vmatpush.msra.mxu0 0.0
    %1509 = vmatpush.msra.mxu0 0.0
    %1510 = vmatpush.msra.mxu0 %v1497
    %1511 = vmatpush.msra.mxu0 %v1475
    %1512 = vmatpush.msra.mxu0 %v1473
    %1513 = vmatpush.msra.mxu0 %v1471
    %1514 = vmatpush.msra.mxu0 %v1469
    %1515 = vmatmul.f32.gmra.mxu0 %v1483
    %v1516 = vpop.f32.mrf.mxu0
    %v1517 = vadd.f32 %v1449, %v1516
    %1518 = vmatmul.f32.gmra.mxu0 %v1486
    %v1519 = vpop.f32.mrf.mxu0
    %v1520 = vadd.f32 %v1452, %v1519
    %1521 = vmatmul.f32.gmra.mxu0 %v1489
    %v1522 = vpop.f32.mrf.mxu0
    %v1523 = vadd.f32 %v1455, %v1522
    %1524 = vmatmul.f32.gmra.mxu0 %v1492
    %v1525 = vpop.f32.mrf.mxu0
    %v1526 = vadd.f32 %v1458, %v1525
    %1527 = vmatmul.f32.gmra.mxu0 %v1495
    %v1528 = vpop.f32.mrf.mxu0
    %v1529 = vadd.f32 %v1461, %v1528
    %1530 = vdwg.mxu0
    %v1531 = vadd.f32 %v966, %v1517
    %v1532 = vadd.f32 %v967, %v1520
    %v1533 = vadd.f32 %v968, %v1523
    %v1534 = vadd.f32 %v969, %v1526
    %v1535 = vadd.f32 %v970, %v1529
    %v1536 = vld [vmem:[%s1 + $0x28] sm:$0x1]
    %v1537 = vld [vmem:[%s1 + $0x29] sm:$0x1]
    %v1538 = vsel %vm106, %v1531, 0.0
    %1539 = vadd.xlane.f32.xlu0 %v1538
    %v1540 = vpop.xlane.xlu0 %1539
    %v1541 = vsel %vm106, %v1532, 0.0
    %1542 = vadd.xlane.f32.xlu0 %v1541
    %v1543 = vpop.xlane.xlu0 %1542
    %v1544 = vsel %vm106, %v1533, 0.0
    %1545 = vadd.xlane.f32.xlu0 %v1544
    %v1546 = vpop.xlane.xlu0 %1545
    %v1547 = vsel %vm106, %v1534, 0.0
    %1548 = vadd.xlane.f32.xlu0 %v1547
    %v1549 = vpop.xlane.xlu0 %1548
    %v1550 = vsel %vm119, %v1535, 0.0
    %1551 = vadd.xlane.f32.xlu0 %v1550
    %v1552 = vpop.xlane.xlu0 %1551
    %v1553 = vmul.f32 %v1540, %v129
    %v1554 = vmul.f32 %v1543, %v129
    %v1555 = vmul.f32 %v1546, %v129
    %v1556 = vmul.f32 %v1549, %v129
    %v1557 = vmul.f32 %v1552, %v129
    %v1558 = vsub.f32 %v1531, %v1553
    %v1559 = vsub.f32 %v1532, %v1554
    %v1560 = vsub.f32 %v1533, %v1555
    %v1561 = vsub.f32 %v1534, %v1556
    %v1562 = vsub.f32 %v1535, %v1557
    %v1563 = vmul.f32 %v1558, %v1558
    %v1564 = vmul.f32 %v1559, %v1559
    %v1565 = vmul.f32 %v1560, %v1560
    %v1566 = vmul.f32 %v1561, %v1561
    %v1567 = vmul.f32 %v1562, %v1562
    %v1568 = vsel %vm106, %v1563, 0.0
    %1569 = vadd.xlane.f32.xlu0 %v1568
    %v1570 = vpop.xlane.xlu0 %1569
    %v1571 = vsel %vm106, %v1564, 0.0
    %1572 = vadd.xlane.f32.xlu0 %v1571
    %v1573 = vpop.xlane.xlu0 %1572
    %v1574 = vsel %vm106, %v1565, 0.0
    %1575 = vadd.xlane.f32.xlu0 %v1574
    %v1576 = vpop.xlane.xlu0 %1575
    %v1577 = vsel %vm106, %v1566, 0.0
    %1578 = vadd.xlane.f32.xlu0 %v1577
    %v1579 = vpop.xlane.xlu0 %1578
    %v1580 = vsel %vm119, %v1567, 0.0
    %1581 = vadd.xlane.f32.xlu0 %v1580
    %v1582 = vpop.xlane.xlu0 %1581
    %v1583 = vmul.f32 %v1570, %v129
    %v1584 = vmul.f32 %v1573, %v129
    %v1585 = vmul.f32 %v1576, %v129
    %v1586 = vmul.f32 %v1579, %v129
    %v1587 = vmul.f32 %v1582, %v129
    %v1588 = vadd.f32 %v1583, 1e-05
    %v1589 = vadd.f32 %v1584, 1e-05
    %v1590 = vadd.f32 %v1585, 1e-05
    %v1591 = vadd.f32 %v1586, 1e-05
    %v1592 = vadd.f32 %v1587, 1e-05
    %v1593 = vrsqrt.pop %v1588
    %v1594 = vmul.f32 %v1593, %v1588
    %v1595 = vmul.f32 %v1594, %v1593
    %v1596 = vmul.f32 0.5, %v1595
    %v1597 = vsub.f32 1.5, %v1596
    %v1598 = vmul.f32 %v1593, %v1597
    %vm1599 = vweird.f32 %v1588
    %vm1600 = vweird.f32 %v1593
    %vm1601 = vmor %vm1599, %vm1600
    %v1602 = vsel %vm1601, %v1593, %v1598
    %v1603 = vrsqrt.pop %v1589
    %v1604 = vmul.f32 %v1603, %v1589
    %v1605 = vmul.f32 %v1604, %v1603
    %v1606 = vmul.f32 0.5, %v1605
    %v1607 = vsub.f32 1.5, %v1606
    %v1608 = vmul.f32 %v1603, %v1607
    %vm1609 = vweird.f32 %v1589
    %vm1610 = vweird.f32 %v1603
    %vm1611 = vmor %vm1609, %vm1610
    %v1612 = vsel %vm1611, %v1603, %v1608
    %v1613 = vrsqrt.pop %v1590
    %v1614 = vmul.f32 %v1613, %v1590
    %v1615 = vmul.f32 %v1614, %v1613
    %v1616 = vmul.f32 0.5, %v1615
    %v1617 = vsub.f32 1.5, %v1616
    %v1618 = vmul.f32 %v1613, %v1617
    %vm1619 = vweird.f32 %v1590
    %vm1620 = vweird.f32 %v1613
    %vm1621 = vmor %vm1619, %vm1620
    %v1622 = vsel %vm1621, %v1613, %v1618
    %v1623 = vrsqrt.pop %v1591
    %v1624 = vmul.f32 %v1623, %v1591
    %v1625 = vmul.f32 %v1624, %v1623
    %v1626 = vmul.f32 0.5, %v1625
    %v1627 = vsub.f32 1.5, %v1626
    %v1628 = vmul.f32 %v1623, %v1627
    %vm1629 = vweird.f32 %v1591
    %vm1630 = vweird.f32 %v1623
    %vm1631 = vmor %vm1629, %vm1630
    %v1632 = vsel %vm1631, %v1623, %v1628
    %v1633 = vrsqrt.pop %v1592
    %v1634 = vmul.f32 %v1633, %v1592
    %v1635 = vmul.f32 %v1634, %v1633
    %v1636 = vmul.f32 0.5, %v1635
    %v1637 = vsub.f32 1.5, %v1636
    %v1638 = vmul.f32 %v1633, %v1637
    %vm1639 = vweird.f32 %v1592
    %vm1640 = vweird.f32 %v1633
    %vm1641 = vmor %vm1639, %vm1640
    %v1642 = vsel %vm1641, %v1633, %v1638
    %v1643 = vmul.f32 %v1558, %v1602
    %v1644 = vmul.f32 %v1559, %v1612
    %v1645 = vmul.f32 %v1560, %v1622
    %v1646 = vmul.f32 %v1561, %v1632
    %v1647 = vmul.f32 %v1562, %v1642
    %v1648 = vperm.slane %v1536, 0
    %v1649 = vmul.f32 %v1643, %v1648
    %v1650 = vmul.f32 %v1644, %v1648
    %v1651 = vmul.f32 %v1645, %v1648
    %v1652 = vmul.f32 %v1646, %v1648
    %v1653 = vmul.f32 %v1647, %v1648
    %v1654 = vperm.slane %v1537, 0
    %v1655 = vadd.f32 %v1649, %v1654
    %v1656 = vadd.f32 %v1650, %v1654
    %v1657 = vadd.f32 %v1651, %v1654
    %v1658 = vadd.f32 %v1652, %v1654
    %v1659 = vadd.f32 %v1653, %v1654
    %s1660 = scalar_lea.vmem %s4, 8
    %v1661 = vld [vmem:[%s1660] sm:$0xff]
    %v1662 = vld [vmem:[%s1 + $0x2d] sm:$0x1]
    %v1663 = vperm.slane %v1662, 0
    %v1665 = vsel %vm106, %v1655, 0
    %v1668 = vsel %vm106, %v1656, 0
    %v1671 = vsel %vm106, %v1657, 0
    %v1674 = vsel %vm106, %v1658, 0
    %v1677 = vsel %vm106, %v1659, 0
    %1679 = vmatpush.msra.mxu0 0.0
    %1680 = vmatpush.msra.mxu0 0.0
    %1681 = vmatpush.msra.mxu0 0.0
    %1682 = vmatpush.msra.mxu0 0.0
    %1683 = vmatpush.msra.mxu0 0.0
    %1684 = vmatpush.msra.mxu0 0.0
    %1685 = vmatpush.msra.mxu0 0.0
    %1686 = vmatpush.msra.mxu0 0.0
    %1687 = vmatpush.msra.mxu0 0.0
    %1688 = vmatpush.msra.mxu0 0.0
    %1689 = vmatpush.msra.mxu0 0.0
    %1690 = vmatpush.msra.mxu0 0.0
    %1691 = vmatpush.msra.mxu0 0.0
    %1692 = vmatpush.msra.mxu0 0.0
    %1693 = vmatpush.msra.mxu0 0.0
    %1694 = vmatpush.msra.mxu0 %v1661
    %1695 = vmatmul.f32.gmra.mxu0 %v1665
    %v1696 = vpop.f32.mrf.mxu0
    %v1697 = vadd.f32 %v1663, %v1696
    %1698 = vmatmul.f32.gmra.mxu0 %v1668
    %v1699 = vpop.f32.mrf.mxu0
    %v1700 = vadd.f32 %v1663, %v1699
    %1701 = vmatmul.f32.gmra.mxu0 %v1671
    %v1702 = vpop.f32.mrf.mxu0
    %v1703 = vadd.f32 %v1663, %v1702
    %1704 = vmatmul.f32.gmra.mxu0 %v1674
    %v1705 = vpop.f32.mrf.mxu0
    %v1706 = vadd.f32 %v1663, %v1705
    %1707 = vmatmul.f32.gmra.mxu0 %v1677
    %v1708 = vpop.f32.mrf.mxu0
    %v1709 = vadd.f32 %v1663, %v1708
    %1710 = vdwg.mxu0
    %v1711 = vmul.f32 %v1697, %v1697
    %v1712 = vmul.f32 %v1700, %v1700
    %v1713 = vmul.f32 %v1703, %v1703
    %v1714 = vmul.f32 %v1706, %v1706
    %v1715 = vmul.f32 %v1709, %v1709
    %v1716 = vmul.f32 %v1697, %v1711
    %v1717 = vmul.f32 %v1700, %v1712
    %v1718 = vmul.f32 %v1703, %v1713
    %v1719 = vmul.f32 %v1706, %v1714
    %v1720 = vmul.f32 %v1709, %v1715
    %v1721 = vmul.f32 %v1716, 0.044715
    %v1722 = vmul.f32 %v1717, 0.044715
    %v1723 = vmul.f32 %v1718, 0.044715
    %v1724 = vmul.f32 %v1719, 0.044715
    %v1725 = vmul.f32 %v1720, 0.044715
    %v1726 = vadd.f32 %v1697, %v1721
    %v1727 = vadd.f32 %v1700, %v1722
    %v1728 = vadd.f32 %v1703, %v1723
    %v1729 = vadd.f32 %v1706, %v1724
    %v1730 = vadd.f32 %v1709, %v1725
    %v1731 = vmul.f32 %v1726, 0.7978846
    %v1732 = vmul.f32 %v1727, 0.7978846
    %v1733 = vmul.f32 %v1728, 0.7978846
    %v1734 = vmul.f32 %v1729, 0.7978846
    %v1735 = vmul.f32 %v1730, 0.7978846
    %v1736 = vtanh.pop %v1731
    %v1737 = vtanh.pop %v1732
    %v1738 = vtanh.pop %v1733
    %v1739 = vtanh.pop %v1734
    %v1740 = vtanh.pop %v1735
    %v1741 = vadd.f32 %v1736, 1.0
    %v1742 = vadd.f32 %v1737, 1.0
    %v1743 = vadd.f32 %v1738, 1.0
    %v1744 = vadd.f32 %v1739, 1.0
    %v1745 = vadd.f32 %v1740, 1.0
    %v1746 = vmul.f32 %v1741, 0.5
    %v1747 = vmul.f32 %v1742, 0.5
    %v1748 = vmul.f32 %v1743, 0.5
    %v1749 = vmul.f32 %v1744, 0.5
    %v1750 = vmul.f32 %v1745, 0.5
    %v1751 = vmul.f32 %v1697, %v1746
    %v1752 = vmul.f32 %v1700, %v1747
    %v1753 = vmul.f32 %v1703, %v1748
    %v1754 = vmul.f32 %v1706, %v1749
    %v1755 = vmul.f32 %v1709, %v1750
    %s1756 = scalar_lea.vmem %s5, 32
    %v1757 = vld [vmem:[%s1756] sm:$0xff]
    %v1758 = vld [vmem:[%s1756 + $0x8] sm:$0xff]
    %v1759 = vld [vmem:[%s1756 + $0x10] sm:$0xff]
    %v1760 = vld [vmem:[%s1756 + $0x18] sm:$0xff]
    %v1762 = vsel %vm911, %v1751, 0
    %v1765 = vsel %vm911, %v1752, 0
    %v1768 = vsel %vm911, %v1753, 0
    %v1771 = vsel %vm911, %v1754, 0
    %v1774 = vsel %vm911, %v1755, 0
    %1776 = vmatpush.msra.mxu0 0.0
    %1777 = vmatpush.msra.mxu0 0.0
    %1778 = vmatpush.msra.mxu0 0.0
    %1779 = vmatpush.msra.mxu0 0.0
    %1780 = vmatpush.msra.mxu0 0.0
    %1781 = vmatpush.msra.mxu0 0.0
    %1782 = vmatpush.msra.mxu0 0.0
    %1783 = vmatpush.msra.mxu0 0.0
    %1784 = vmatpush.msra.mxu0 0.0
    %1785 = vmatpush.msra.mxu0 0.0
    %1786 = vmatpush.msra.mxu0 0.0
    %1787 = vmatpush.msra.mxu0 0.0
    %1788 = vmatpush.msra.mxu0 %v1760
    %1789 = vmatpush.msra.mxu0 %v1759
    %1790 = vmatpush.msra.mxu0 %v1758
    %1791 = vmatpush.msra.mxu0 %v1757
    %1792 = vmatmul.f32.gmra.mxu0 %v1762
    %v1793 = vpop.f32.mrf.mxu0
    %v1794 = vadd.f32 0.0, %v1793
    %1795 = vmatmul.f32.gmra.mxu0 %v1765
    %v1796 = vpop.f32.mrf.mxu0
    %v1797 = vadd.f32 0.0, %v1796
    %1798 = vmatmul.f32.gmra.mxu0 %v1768
    %v1799 = vpop.f32.mrf.mxu0
    %v1800 = vadd.f32 0.0, %v1799
    %1801 = vmatmul.f32.gmra.mxu0 %v1771
    %v1802 = vpop.f32.mrf.mxu0
    %v1803 = vadd.f32 0.0, %v1802
    %1804 = vmatmul.f32.gmra.mxu0 %v1774
    %v1805 = vpop.f32.mrf.mxu0
    %v1806 = vadd.f32 0.0, %v1805
    %1807 = vdwg.mxu0
    %v1808 = vadd.f32 %v1531, %v1794
    %v1809 = vadd.f32 %v1532, %v1797
    %v1810 = vadd.f32 %v1533, %v1800
    %v1811 = vadd.f32 %v1534, %v1803
    %v1812 = vadd.f32 %v1535, %v1806
    %v1813 = vld [vmem:[%s1 + $0x2f] sm:$0x1]
    %v1814 = vperm.slane %v1813, 0
    %v1815 = vadd.f32 %v1808, %v1814
    %v1816 = vadd.f32 %v1809, %v1814
    %v1817 = vadd.f32 %v1810, %v1814
    %v1818 = vadd.f32 %v1811, %v1814
    %v1819 = vadd.f32 %v1812, %v1814
    %v1820 = vlaneseq
    %v1821 = vshrl.u32 %v1820, 7
    %v1822 = vmul.u32 %v1821, 17
    %vm1823 = vcmp.eq.s32.totalorder %v28, %v1822
    %v1824 = vsel %vm1823, 1, 0
    %v1825 = vcvt.s32.f32 %v1824
    %v1827 = vsel %vm364, %v1825, 0
    %v1830 = vsel %vm580, %v1819, 0
    %1832 = vmatpush.msra.mxu0 0.0
    %1833 = vmatpush.msra.mxu0 0.0
    %1834 = vmatpush.msra.mxu0 0.0
    %1835 = vmatpush.msra.mxu0 0.0
    %1836 = vmatpush.msra.mxu0 0.0
    %1837 = vmatpush.msra.mxu0 0.0
    %1838 = vmatpush.msra.mxu0 0.0
    %1839 = vmatpush.msra.mxu0 0.0
    %1840 = vmatpush.msra.mxu0 0.0
    %1841 = vmatpush.msra.mxu0 0.0
    %1842 = vmatpush.msra.mxu0 0.0
    %1843 = vmatpush.msra.mxu0 %v1830
    %1844 = vmatpush.msra.mxu0 %v1818
    %1845 = vmatpush.msra.mxu0 %v1817
    %1846 = vmatpush.msra.mxu0 %v1816
    %1847 = vmatpush.msra.mxu0 %v1815
    %1848 = vmatmul.f32.gmra.mxu0 %v1827
    %v1849 = vpop.f32.mrf.mxu0
    %v1850 = vadd.f32 0.0, %v1849
    %1851 = vdwg.mxu0
    %v1852 = vld [vmem:[%s6] sm:$0xff]
    %v1853 = vld [vmem:[%s1 + $0x30] sm:$0x1]
    %v1854 = vperm.slane %v1853, 0
    %v1856 = vsel %vm106, %v1850, 0
    %1858 = vmatpush.msra.mxu0 0.0
    %1859 = vmatpush.msra.mxu0 0.0
    %1860 = vmatpush.msra.mxu0 0.0
    %1861 = vmatpush.msra.mxu0 0.0
    %1862 = vmatpush.msra.mxu0 0.0
    %1863 = vmatpush.msra.mxu0 0.0
    %1864 = vmatpush.msra.mxu0 0.0
    %1865 = vmatpush.msra.mxu0 0.0
    %1866 = vmatpush.msra.mxu0 0.0
    %1867 = vmatpush.msra.mxu0 0.0
    %1868 = vmatpush.msra.mxu0 0.0
    %1869 = vmatpush.msra.mxu0 0.0
    %1870 = vmatpush.msra.mxu0 0.0
    %1871 = vmatpush.msra.mxu0 0.0
    %1872 = vmatpush.msra.mxu0 0.0
    %1873 = vmatpush.msra.mxu0 %v1852
    %1874 = vmatmul.f32.gmra.mxu0 %v1856
    %v1875 = vpop.f32.mrf.mxu0
    %v1876 = vadd.f32 %v1854, %v1875
    %1877 = vdwg.mxu0
    %v1878 = vsel %vm580, %v1876, -inf
    %1879 = vmax.xlane.f32.xlu0 %v1878
    %v1880 = vpop.xlane.xlu0 %1879
    %v1881 = vsub.f32 %v1876, %v1880
    %v1882 = vmul.f32 %v1881, 1.442695
    %v1883 = vpow.pop %v1882
    %v1884 = vsel %vm580, %v1883, 0.0
    %1885 = vadd.xlane.f32.xlu0 %v1884
    %v1886 = vpop.xlane.xlu0 %1885
    %v1887 = vrcp.pop %v1886
    %v1888 = vmul.f32 %v1886, %v1887
    %v1889 = vsub.f32 1.0, %v1888
    %v1890 = vmul.f32 %v1887, %v1889
    %v1891 = vadd.f32 %v1887, %v1890
    %vm1892 = vweird.f32 %v1886
    %vm1893 = vweird.f32 %v1887
    %vm1894 = vmor %vm1892, %vm1893
    %v1895 = vsel %vm1894, %v1887, %v1891
    %v1896 = vand.u32 2147483647, %v1886
    %vm1897 = vcmp.eq.f32.partialorder %v1896, 8.507059e+37
    %v1898 = vand.u32 %v1886, 2147483648
    %v1899 = vor.u32 1.1754944e-38, %v1898
    %v1900 = vsel %vm1897, %v1899, %v1895
    %v1901 = vmul.f32 %v1883, %v1900
    %1902 = vst [vmem:[#allocation2] sm:$0x3] %v1901
    // Predicated region
    $region30: #{tpu_custom_call.1} parent=1 // pred_check
      _
    $region31: #{tpu_custom_call.1} parent=1 // pred_check_branch
      %1904 = sbr.rel (0) target = $region33
    $region32: #{tpu_custom_call.1} parent=1 // pred_region
      %1906 = vsyncadd [#allocation3], 0
      %s1908 = sshll.u32 [#allocation2], 4
      %s1909 = int_to_ptr.vmem [resolvable:$true] %s1908
      %s1910 = sshll.u32 %s7, 4
      %s1911 = int_to_ptr.hbm [resolvable:$true] %s1910
      %1913 = dma.vmem_to_hbm [thread:$0]  %s1909, 32, %s1911, [#allocation3]
    $region33: #{tpu_custom_call.1} parent=1 // pred_fallthru
      _
    // Predicated region
    $region34: #{tpu_custom_call.1} parent=1 // pred_check
      _
    $region35: #{tpu_custom_call.1} parent=1 // pred_check_branch
      %1915 = sbr.rel (0) target = $region37
    $region36: #{tpu_custom_call.1} parent=1 // pred_region
      %1917 = dma.done [#allocation3], 32
    $region37: #{tpu_custom_call.1} parent=1 // pred_fallthru
      _
    %1918 = vsyncpa [#allocation3], 1

</llo_original>
